<compile_context>
chip_gen: v7x
topology: tpu7x:2x2x1
jax: 0.10.0
libtpu: 0.0.40
codegen_flags: <defaults>
</compile_context>

<pallas_src>
import jax
import jax.numpy as jnp
from jax.experimental import pallas as pl
from jax.experimental.pallas import tpu as pltpu


# ----------------------------------------------------------------------------
# Fused kernel: all LSTM layers + decoder, time loop unrolled in-kernel.
# Gate order follows PyTorch: i, f, g, o.
# ----------------------------------------------------------------------------
def _char_lstm_kernel(x_ref, h0_ref, c0_ref, wih_ref, whh_ref, b_ref,
                      wdec_ref, bdec_ref, out_ref, hT_ref, cT_ref, seq_scr):
    """Shapes:
      x_ref:    (T*B, H)   embedded sequence, time-major flat (row = t*B + b)
      h0_ref:   (L, B, H)  initial hidden state
      c0_ref:   (L, B, H)  initial cell state
      wih_ref:  (L, H, 4H) W_ih^T per layer
      whh_ref:  (L, H, 4H) W_hh^T per layer
      b_ref:    (L, 1, 4H) b_ih + b_hh per layer
      wdec_ref: (H, O)     decoder weight (transposed)
      bdec_ref: (1, O)     decoder bias
      out_ref:  (T*B, O)   decoder output (lane-dense, time-major flat)
      hT_ref:   (L, B, H)  final hidden state
      cT_ref:   (L, B, H)  final cell state
      seq_scr:  (T*B, H)   VMEM scratch: current layer's sequence
    """
    n_layers, batch, hidden = h0_ref.shape
    seq_len = x_ref.shape[0] // batch
    H = hidden

    # The sequence buffer starts as the embedded input; layer l overwrites it
    # in place with its own hidden outputs (safe: row block t is never re-read
    # after step t within a layer), so it becomes layer l+1's input.
    seq_scr[...] = x_ref[...]

    for layer in range(n_layers):
        w_ih = wih_ref[layer]          # (H, 4H)
        w_hh = whh_ref[layer]          # (H, 4H)
        bias = b_ref[layer]            # (1, 4H)

        # Input-side gate pre-activations for the whole sequence:
        # one MXU matmul per layer instead of one per time step.
        xg = jnp.dot(seq_scr[...], w_ih,
                     preferred_element_type=jnp.float32) + bias    # (T*B, 4H)

        h = h0_ref[layer]              # (B, H)
        c = c0_ref[layer]              # (B, H)
        for t in range(seq_len):       # static unroll: T is small and known
            gates = xg[t * batch:(t + 1) * batch, :] + jnp.dot(
                h, w_hh, preferred_element_type=jnp.float32)       # (B, 4H)
            i_g = jax.nn.sigmoid(gates[:, 0 * H:1 * H])
            f_g = jax.nn.sigmoid(gates[:, 1 * H:2 * H])
            g_g = jnp.tanh(gates[:, 2 * H:3 * H])
            o_g = jax.nn.sigmoid(gates[:, 3 * H:4 * H])
            c = f_g * c + i_g * g_g
            h = o_g * jnp.tanh(c)
            seq_scr[t * batch:(t + 1) * batch, :] = h
        hT_ref[layer] = h
        cT_ref[layer] = c

    # Fused decoder over the whole sequence: single (T*B, H) @ (H, O) matmul,
    # lane-dense output store.
    out_ref[...] = (jnp.dot(seq_scr[...], wdec_ref[...],
                            preferred_element_type=jnp.float32)
                    + bdec_ref[...])


def char_lstm_forward(x_flat, h0, c0, w_ih, w_hh, b, w_dec, b_dec):
    """x_flat: (T*B, H); h0/c0: (L, B, H); w_ih/w_hh: (L, H, 4H);
    b: (L, 1, 4H); w_dec: (H, O); b_dec: (1, O)."""
    TB, H = x_flat.shape
    L, B, _ = h0.shape
    O = w_dec.shape[1]
    return pl.pallas_call(
        _char_lstm_kernel,
        out_shape=(
            jax.ShapeDtypeStruct((TB, O), jnp.float32),
            jax.ShapeDtypeStruct((L, B, H), jnp.float32),
            jax.ShapeDtypeStruct((L, B, H), jnp.float32),
        ),
        scratch_shapes=[pltpu.VMEM((TB, H), jnp.float32)],
    )(x_flat, h0, c0, w_ih, w_hh, b, w_dec, b_dec)


# ----------------------------------------------------------------------------
# CharLSTM module (parameters built deterministically in-script).
# ----------------------------------------------------------------------------
class CharLSTM:
    def __init__(self, input_size, hidden_size, output_size, n_layers=1, key=None):
        self.input_size = input_size
        self.hidden_size = hidden_size
        self.output_size = output_size
        self.n_layers = n_layers
        if key is None:
            key = jax.random.PRNGKey(0)
        keys = jax.random.split(key, 3 + 4 * n_layers)
        H = hidden_size
        scale = 1.0 / jnp.sqrt(jnp.float32(H))

        # Embedding: (vocab, H) ~ N(0, 1) as in nn.Embedding.
        self.embedding = jax.random.normal(keys[0], (input_size, H), jnp.float32)

        # LSTM layers: transposed weights stacked over layers.
        wih_l, whh_l, b_l = [], [], []
        kidx = 1
        for _ in range(n_layers):
            w_ih = jax.random.uniform(keys[kidx], (H, 4 * H), jnp.float32,
                                      -scale, scale); kidx += 1
            w_hh = jax.random.uniform(keys[kidx], (H, 4 * H), jnp.float32,
                                      -scale, scale); kidx += 1
            b_ih = jax.random.uniform(keys[kidx], (4 * H,), jnp.float32,
                                      -scale, scale); kidx += 1
            b_hh = jax.random.uniform(keys[kidx], (4 * H,), jnp.float32,
                                      -scale, scale); kidx += 1
            wih_l.append(w_ih)
            whh_l.append(w_hh)
            b_l.append((b_ih + b_hh).reshape(1, 4 * H))
        self.w_ih = jnp.stack(wih_l, axis=0)   # (L, H, 4H)
        self.w_hh = jnp.stack(whh_l, axis=0)   # (L, H, 4H)
        self.b = jnp.stack(b_l, axis=0)        # (L, 1, 4H)

        # Decoder: Linear(H, O), stored transposed.
        self.w_dec = jax.random.uniform(keys[kidx], (H, output_size), jnp.float32,
                                        -scale, scale)
        self.b_dec = jax.random.uniform(keys[kidx + 1], (1, output_size),
                                        jnp.float32, -scale, scale)

    def init_hidden(self, batch_size):
        z = jnp.zeros((self.n_layers, batch_size, self.hidden_size), jnp.float32)
        return (z, z)

    def __call__(self, tokens, hidden):
        """tokens: (B, T) int32; hidden: (h0, c0) each (n_layers, B, H)."""
        h0, c0 = hidden
        B, T = tokens.shape
        # Gather embeddings directly into the time-major flat layout the
        # kernel wants (row = t*B + b): no standalone transpose op on x.
        flat_ids = jnp.reshape(jnp.transpose(tokens), (-1,))        # (T*B,)
        x_flat = jnp.take(self.embedding, flat_ids, axis=0)          # (T*B, H)

        out_flat, hT, cT = char_lstm_forward(
            x_flat, h0, c0, self.w_ih, self.w_hh, self.b, self.w_dec, self.b_dec)

        # Back to PyTorch batch_first (B, T, O).
        out = jnp.transpose(out_flat.reshape(T, B, self.output_size), (1, 0, 2))
        return out, (hT, cT)


# ----------------------------------------------------------------------------
# Pure-JAX reference (lax.scan) for a correctness check.
# ----------------------------------------------------------------------------
def reference_forward(model, tokens, hidden):
    h0_all, c0_all = hidden
    H = model.hidden_size
    x = model.embedding[tokens]                    # (B, T, H)
    x = jnp.transpose(x, (1, 0, 2))                # (T, B, H)

    h_finals, c_finals = [], []
    for layer in range(model.n_layers):
        w_ih = model.w_ih[layer]
        w_hh = model.w_hh[layer]
        b = model.b[layer]

        def step(carry, x_t):
            h, c = carry
            gates = x_t @ w_ih + h @ w_hh + b
            i = jax.nn.sigmoid(gates[:, 0 * H:1 * H])
            f = jax.nn.sigmoid(gates[:, 1 * H:2 * H])
            g = jnp.tanh(gates[:, 2 * H:3 * H])
            o = jax.nn.sigmoid(gates[:, 3 * H:4 * H])
            c_new = f * c + i * g
            h_new = o * jnp.tanh(c_new)
            return (h_new, c_new), h_new

        (hT, cT), y = jax.lax.scan(step, (h0_all[layer], c0_all[layer]), x)
        x = y
        h_finals.append(hT)
        c_finals.append(cT)

    out = x @ model.w_dec + model.b_dec            # (T, B, O)
    out = jnp.transpose(out, (1, 0, 2))            # (B, T, O)
    return out, (jnp.stack(h_finals), jnp.stack(c_finals))


if __name__ == "__main__":
    # Small shapes consistent with the module: vocab=64, hidden=32, out=64.
    VOCAB, HIDDEN, OUT, N_LAYERS = 64, 32, 64, 2
    BATCH, SEQ = 2, 8

    key = jax.random.PRNGKey(0)
    k_tok, k_model = jax.random.split(key)

    model = CharLSTM(VOCAB, HIDDEN, OUT, n_layers=N_LAYERS, key=k_model)
    tokens = jax.random.randint(k_tok, (BATCH, SEQ), 0, VOCAB, dtype=jnp.int32)
    hidden = model.init_hidden(BATCH)

    out, (h, c) = model(tokens, hidden)
    jax.block_until_ready((out, h, c))

    # Sanity-check against pure-JAX reference.
    out_ref, (h_ref, c_ref) = reference_forward(model, tokens, hidden)
    assert out.shape == (BATCH, SEQ, OUT)
    assert h.shape == (N_LAYERS, BATCH, HIDDEN) and c.shape == (N_LAYERS, BATCH, HIDDEN)
    assert jnp.allclose(out, out_ref, rtol=1e-3, atol=1e-3)
    assert jnp.allclose(h, h_ref, rtol=1e-3, atol=1e-3)
    assert jnp.allclose(c, c_ref, rtol=1e-3, atol=1e-3)

    print("KERNEL_OK")
</pallas_src>

<mosaic_0001>
module attributes {stable_mosaic.version = 11 : i64} {
  func.func @_char_lstm_kernel(%arg0: memref<16x32xf32, #tpu.memory_space<vmem>>, %arg1: memref<2x2x32xf32, #tpu.memory_space<vmem>>, %arg2: memref<2x2x32xf32, #tpu.memory_space<vmem>>, %arg3: memref<2x32x128xf32, #tpu.memory_space<vmem>>, %arg4: memref<2x32x128xf32, #tpu.memory_space<vmem>>, %arg5: memref<2x1x128xf32, #tpu.memory_space<vmem>>, %arg6: memref<32x64xf32, #tpu.memory_space<vmem>>, %arg7: memref<1x64xf32, #tpu.memory_space<vmem>>, %arg8: memref<16x64xf32, #tpu.memory_space<vmem>>, %arg9: memref<2x2x32xf32, #tpu.memory_space<vmem>>, %arg10: memref<2x2x32xf32, #tpu.memory_space<vmem>>, %arg11: memref<16x32xf32, #tpu.memory_space<vmem>>) attributes {dimension_semantics = [], scalar_prefetch = 0 : i64, scratch_operands = 1 : i64, tpu.core_type = #tpu.core_type<tc>} {
    %c0 = arith.constant 0 : index
    %c0_0 = arith.constant 0 : index
    %0 = vector.load %arg0[%c0, %c0_0] : memref<16x32xf32, #tpu.memory_space<vmem>>, vector<16x32xf32>
    %c0_1 = arith.constant 0 : index
    %c0_2 = arith.constant 0 : index
    %1 = vector.load %arg11[%c0_1, %c0_2] : memref<16x32xf32, #tpu.memory_space<vmem>>, vector<16x32xf32>
    tpu.vector_store %arg11[%c0_1, %c0_2], %0 {strides = array<i32>} : memref<16x32xf32, #tpu.memory_space<vmem>>, vector<16x32xf32>,
    %c0_3 = arith.constant 0 : index
    %c0_4 = arith.constant 0 : index
    %c0_5 = arith.constant 0 : index
    %2 = vector.load %arg3[%c0_3, %c0_4, %c0_5] : memref<2x32x128xf32, #tpu.memory_space<vmem>>, vector<1x32x128xf32>
    %3 = vector.shape_cast %2 : vector<1x32x128xf32> to vector<32x128xf32>
    %c0_6 = arith.constant 0 : index
    %c0_7 = arith.constant 0 : index
    %c0_8 = arith.constant 0 : index
    %4 = vector.load %arg4[%c0_6, %c0_7, %c0_8] : memref<2x32x128xf32, #tpu.memory_space<vmem>>, vector<1x32x128xf32>
    %5 = vector.shape_cast %4 : vector<1x32x128xf32> to vector<32x128xf32>
    %c0_9 = arith.constant 0 : index
    %c0_10 = arith.constant 0 : index
    %c0_11 = arith.constant 0 : index
    %6 = vector.load %arg5[%c0_9, %c0_10, %c0_11] : memref<2x1x128xf32, #tpu.memory_space<vmem>>, vector<1x1x128xf32>
    %7 = vector.shape_cast %6 : vector<1x1x128xf32> to vector<1x128xf32>
    %c0_12 = arith.constant 0 : index
    %c0_13 = arith.constant 0 : index
    %8 = vector.load %arg11[%c0_12, %c0_13] : memref<16x32xf32, #tpu.memory_space<vmem>>, vector<16x32xf32>
    %cst = arith.constant dense<0.000000e+00> : vector<16x128xf32>
    %9 = tpu.matmul %8, %3, %cst {dimension_numbers = #tpu.dot_dimension_numbers<[1], [0], [0], [1], [0, 0, 1, 1], [], []>} : vector<16x32xf32>, vector<32x128xf32>, vector<16x128xf32> -> vector<16x128xf32>
    %10 = vector.broadcast %7 : vector<1x128xf32> to vector<16x128xf32>
    %11 = arith.addf %9, %10 : vector<16x128xf32>
    %c0_14 = arith.constant 0 : index
    %c0_15 = arith.constant 0 : index
    %c0_16 = arith.constant 0 : index
    %12 = vector.load %arg1[%c0_14, %c0_15, %c0_16] : memref<2x2x32xf32, #tpu.memory_space<vmem>>, vector<1x2x32xf32>
    %13 = vector.shape_cast %12 : vector<1x2x32xf32> to vector<2x32xf32>
    %c0_17 = arith.constant 0 : index
    %c0_18 = arith.constant 0 : index
    %c0_19 = arith.constant 0 : index
    %14 = vector.load %arg2[%c0_17, %c0_18, %c0_19] : memref<2x2x32xf32, #tpu.memory_space<vmem>>, vector<1x2x32xf32>
    %15 = vector.shape_cast %14 : vector<1x2x32xf32> to vector<2x32xf32>
    %16 = vector.extract_strided_slice %11 {offsets = [0, 0], sizes = [2, 128], strides = [1, 1]} : vector<16x128xf32> to vector<2x128xf32>
    %cst_20 = arith.constant dense<0.000000e+00> : vector<2x128xf32>
    %17 = tpu.matmul %13, %5, %cst_20 {dimension_numbers = #tpu.dot_dimension_numbers<[1], [0], [0], [1], [0, 0, 1, 1], [], []>} : vector<2x32xf32>, vector<32x128xf32>, vector<2x128xf32> -> vector<2x128xf32>
    %18 = arith.addf %16, %17 : vector<2x128xf32>
    %19 = vector.extract_strided_slice %18 {offsets = [0, 0], sizes = [2, 32], strides = [1, 1]} : vector<2x128xf32> to vector<2x32xf32>
    %20 = arith.negf %19 : vector<2x32xf32>
    %21 = math.exp %20 : vector<2x32xf32>
    %cst_21 = arith.constant 1.000000e+00 : f32
    %22 = vector.broadcast %cst_21 : f32 to vector<2x32xf32>
    %23 = arith.addf %22, %21 : vector<2x32xf32>
    %24 = arith.divf %22, %23 : vector<2x32xf32>
    %25 = vector.extract_strided_slice %18 {offsets = [0, 32], sizes = [2, 32], strides = [1, 1]} : vector<2x128xf32> to vector<2x32xf32>
    %26 = arith.negf %25 : vector<2x32xf32>
    %27 = math.exp %26 : vector<2x32xf32>
    %cst_22 = arith.constant 1.000000e+00 : f32
    %28 = vector.broadcast %cst_22 : f32 to vector<2x32xf32>
    %29 = arith.addf %28, %27 : vector<2x32xf32>
    %30 = arith.divf %28, %29 : vector<2x32xf32>
    %31 = vector.extract_strided_slice %18 {offsets = [0, 64], sizes = [2, 32], strides = [1, 1]} : vector<2x128xf32> to vector<2x32xf32>
    %32 = math.tanh %31 : vector<2x32xf32>
    %33 = vector.extract_strided_slice %18 {offsets = [0, 96], sizes = [2, 32], strides = [1, 1]} : vector<2x128xf32> to vector<2x32xf32>
    %34 = arith.negf %33 : vector<2x32xf32>
    %35 = math.exp %34 : vector<2x32xf32>
    %cst_23 = arith.constant 1.000000e+00 : f32
    %36 = vector.broadcast %cst_23 : f32 to vector<2x32xf32>
    %37 = arith.addf %36, %35 : vector<2x32xf32>
    %38 = arith.divf %36, %37 : vector<2x32xf32>
    %39 = arith.mulf %30, %15 : vector<2x32xf32>
    %40 = arith.mulf %24, %32 : vector<2x32xf32>
    %41 = arith.addf %39, %40 : vector<2x32xf32>
    %42 = math.tanh %41 : vector<2x32xf32>
    %43 = arith.mulf %38, %42 : vector<2x32xf32>
    %c0_24 = arith.constant 0 : index
    %c0_25 = arith.constant 0 : index
    %44 = vector.load %arg11[%c0_24, %c0_25] : memref<16x32xf32, #tpu.memory_space<vmem>>, vector<2x32xf32>
    tpu.vector_store %arg11[%c0_24, %c0_25], %43 {strides = array<i32>} : memref<16x32xf32, #tpu.memory_space<vmem>>, vector<2x32xf32>,
    %45 = vector.extract_strided_slice %11 {offsets = [2, 0], sizes = [2, 128], strides = [1, 1]} : vector<16x128xf32> to vector<2x128xf32>
    %cst_26 = arith.constant dense<0.000000e+00> : vector<2x128xf32>
    %46 = tpu.matmul %43, %5, %cst_26 {dimension_numbers = #tpu.dot_dimension_numbers<[1], [0], [0], [1], [0, 0, 1, 1], [], []>} : vector<2x32xf32>, vector<32x128xf32>, vector<2x128xf32> -> vector<2x128xf32>
    %47 = arith.addf %45, %46 : vector<2x128xf32>
    %48 = vector.extract_strided_slice %47 {offsets = [0, 0], sizes = [2, 32], strides = [1, 1]} : vector<2x128xf32> to vector<2x32xf32>
    %49 = arith.negf %48 : vector<2x32xf32>
    %50 = math.exp %49 : vector<2x32xf32>
    %cst_27 = arith.constant 1.000000e+00 : f32
    %51 = vector.broadcast %cst_27 : f32 to vector<2x32xf32>
    %52 = arith.addf %51, %50 : vector<2x32xf32>
    %53 = arith.divf %51, %52 : vector<2x32xf32>
    %54 = vector.extract_strided_slice %47 {offsets = [0, 32], sizes = [2, 32], strides = [1, 1]} : vector<2x128xf32> to vector<2x32xf32>
    %55 = arith.negf %54 : vector<2x32xf32>
    %56 = math.exp %55 : vector<2x32xf32>
    %cst_28 = arith.constant 1.000000e+00 : f32
    %57 = vector.broadcast %cst_28 : f32 to vector<2x32xf32>
    %58 = arith.addf %57, %56 : vector<2x32xf32>
    %59 = arith.divf %57, %58 : vector<2x32xf32>
    %60 = vector.extract_strided_slice %47 {offsets = [0, 64], sizes = [2, 32], strides = [1, 1]} : vector<2x128xf32> to vector<2x32xf32>
    %61 = math.tanh %60 : vector<2x32xf32>
    %62 = vector.extract_strided_slice %47 {offsets = [0, 96], sizes = [2, 32], strides = [1, 1]} : vector<2x128xf32> to vector<2x32xf32>
    %63 = arith.negf %62 : vector<2x32xf32>
    %64 = math.exp %63 : vector<2x32xf32>
    %cst_29 = arith.constant 1.000000e+00 : f32
    %65 = vector.broadcast %cst_29 : f32 to vector<2x32xf32>
    %66 = arith.addf %65, %64 : vector<2x32xf32>
    %67 = arith.divf %65, %66 : vector<2x32xf32>
    %68 = arith.mulf %59, %41 : vector<2x32xf32>
    %69 = arith.mulf %53, %61 : vector<2x32xf32>
    %70 = arith.addf %68, %69 : vector<2x32xf32>
    %71 = math.tanh %70 : vector<2x32xf32>
    %72 = arith.mulf %67, %71 : vector<2x32xf32>
    %c2 = arith.constant 2 : index
    %c0_30 = arith.constant 0 : index
    %73 = vector.load %arg11[%c2, %c0_30] : memref<16x32xf32, #tpu.memory_space<vmem>>, vector<2x32xf32>
    tpu.vector_store %arg11[%c2, %c0_30], %72 {strides = array<i32>} : memref<16x32xf32, #tpu.memory_space<vmem>>, vector<2x32xf32>,
    %74 = vector.extract_strided_slice %11 {offsets = [4, 0], sizes = [2, 128], strides = [1, 1]} : vector<16x128xf32> to vector<2x128xf32>
    %cst_31 = arith.constant dense<0.000000e+00> : vector<2x128xf32>
    %75 = tpu.matmul %72, %5, %cst_31 {dimension_numbers = #tpu.dot_dimension_numbers<[1], [0], [0], [1], [0, 0, 1, 1], [], []>} : vector<2x32xf32>, vector<32x128xf32>, vector<2x128xf32> -> vector<2x128xf32>
    %76 = arith.addf %74, %75 : vector<2x128xf32>
    %77 = vector.extract_strided_slice %76 {offsets = [0, 0], sizes = [2, 32], strides = [1, 1]} : vector<2x128xf32> to vector<2x32xf32>
    %78 = arith.negf %77 : vector<2x32xf32>
    %79 = math.exp %78 : vector<2x32xf32>
    %cst_32 = arith.constant 1.000000e+00 : f32
    %80 = vector.broadcast %cst_32 : f32 to vector<2x32xf32>
    %81 = arith.addf %80, %79 : vector<2x32xf32>
    %82 = arith.divf %80, %81 : vector<2x32xf32>
    %83 = vector.extract_strided_slice %76 {offsets = [0, 32], sizes = [2, 32], strides = [1, 1]} : vector<2x128xf32> to vector<2x32xf32>
    %84 = arith.negf %83 : vector<2x32xf32>
    %85 = math.exp %84 : vector<2x32xf32>
    %cst_33 = arith.constant 1.000000e+00 : f32
    %86 = vector.broadcast %cst_33 : f32 to vector<2x32xf32>
    %87 = arith.addf %86, %85 : vector<2x32xf32>
    %88 = arith.divf %86, %87 : vector<2x32xf32>
    %89 = vector.extract_strided_slice %76 {offsets = [0, 64], sizes = [2, 32], strides = [1, 1]} : vector<2x128xf32> to vector<2x32xf32>
    %90 = math.tanh %89 : vector<2x32xf32>
    %91 = vector.extract_strided_slice %76 {offsets = [0, 96], sizes = [2, 32], strides = [1, 1]} : vector<2x128xf32> to vector<2x32xf32>
    %92 = arith.negf %91 : vector<2x32xf32>
    %93 = math.exp %92 : vector<2x32xf32>
    %cst_34 = arith.constant 1.000000e+00 : f32
    %94 = vector.broadcast %cst_34 : f32 to vector<2x32xf32>
    %95 = arith.addf %94, %93 : vector<2x32xf32>
    %96 = arith.divf %94, %95 : vector<2x32xf32>
    %97 = arith.mulf %88, %70 : vector<2x32xf32>
    %98 = arith.mulf %82, %90 : vector<2x32xf32>
    %99 = arith.addf %97, %98 : vector<2x32xf32>
    %100 = math.tanh %99 : vector<2x32xf32>
    %101 = arith.mulf %96, %100 : vector<2x32xf32>
    %c4 = arith.constant 4 : index
    %c0_35 = arith.constant 0 : index
    %102 = vector.load %arg11[%c4, %c0_35] : memref<16x32xf32, #tpu.memory_space<vmem>>, vector<2x32xf32>
    tpu.vector_store %arg11[%c4, %c0_35], %101 {strides = array<i32>} : memref<16x32xf32, #tpu.memory_space<vmem>>, vector<2x32xf32>,
    %103 = vector.extract_strided_slice %11 {offsets = [6, 0], sizes = [2, 128], strides = [1, 1]} : vector<16x128xf32> to vector<2x128xf32>
    %cst_36 = arith.constant dense<0.000000e+00> : vector<2x128xf32>
    %104 = tpu.matmul %101, %5, %cst_36 {dimension_numbers = #tpu.dot_dimension_numbers<[1], [0], [0], [1], [0, 0, 1, 1], [], []>} : vector<2x32xf32>, vector<32x128xf32>, vector<2x128xf32> -> vector<2x128xf32>
    %105 = arith.addf %103, %104 : vector<2x128xf32>
    %106 = vector.extract_strided_slice %105 {offsets = [0, 0], sizes = [2, 32], strides = [1, 1]} : vector<2x128xf32> to vector<2x32xf32>
    %107 = arith.negf %106 : vector<2x32xf32>
    %108 = math.exp %107 : vector<2x32xf32>
    %cst_37 = arith.constant 1.000000e+00 : f32
    %109 = vector.broadcast %cst_37 : f32 to vector<2x32xf32>
    %110 = arith.addf %109, %108 : vector<2x32xf32>
    %111 = arith.divf %109, %110 : vector<2x32xf32>
    %112 = vector.extract_strided_slice %105 {offsets = [0, 32], sizes = [2, 32], strides = [1, 1]} : vector<2x128xf32> to vector<2x32xf32>
    %113 = arith.negf %112 : vector<2x32xf32>
    %114 = math.exp %113 : vector<2x32xf32>
    %cst_38 = arith.constant 1.000000e+00 : f32
    %115 = vector.broadcast %cst_38 : f32 to vector<2x32xf32>
    %116 = arith.addf %115, %114 : vector<2x32xf32>
    %117 = arith.divf %115, %116 : vector<2x32xf32>
    %118 = vector.extract_strided_slice %105 {offsets = [0, 64], sizes = [2, 32], strides = [1, 1]} : vector<2x128xf32> to vector<2x32xf32>
    %119 = math.tanh %118 : vector<2x32xf32>
    %120 = vector.extract_strided_slice %105 {offsets = [0, 96], sizes = [2, 32], strides = [1, 1]} : vector<2x128xf32> to vector<2x32xf32>
    %121 = arith.negf %120 : vector<2x32xf32>
    %122 = math.exp %121 : vector<2x32xf32>
    %cst_39 = arith.constant 1.000000e+00 : f32
    %123 = vector.broadcast %cst_39 : f32 to vector<2x32xf32>
    %124 = arith.addf %123, %122 : vector<2x32xf32>
    %125 = arith.divf %123, %124 : vector<2x32xf32>
    %126 = arith.mulf %117, %99 : vector<2x32xf32>
    %127 = arith.mulf %111, %119 : vector<2x32xf32>
    %128 = arith.addf %126, %127 : vector<2x32xf32>
    %129 = math.tanh %128 : vector<2x32xf32>
    %130 = arith.mulf %125, %129 : vector<2x32xf32>
    %c6 = arith.constant 6 : index
    %c0_40 = arith.constant 0 : index
    %131 = vector.load %arg11[%c6, %c0_40] : memref<16x32xf32, #tpu.memory_space<vmem>>, vector<2x32xf32>
    tpu.vector_store %arg11[%c6, %c0_40], %130 {strides = array<i32>} : memref<16x32xf32, #tpu.memory_space<vmem>>, vector<2x32xf32>,
    %132 = vector.extract_strided_slice %11 {offsets = [8, 0], sizes = [2, 128], strides = [1, 1]} : vector<16x128xf32> to vector<2x128xf32>
    %cst_41 = arith.constant dense<0.000000e+00> : vector<2x128xf32>
    %133 = tpu.matmul %130, %5, %cst_41 {dimension_numbers = #tpu.dot_dimension_numbers<[1], [0], [0], [1], [0, 0, 1, 1], [], []>} : vector<2x32xf32>, vector<32x128xf32>, vector<2x128xf32> -> vector<2x128xf32>
    %134 = arith.addf %132, %133 : vector<2x128xf32>
    %135 = vector.extract_strided_slice %134 {offsets = [0, 0], sizes = [2, 32], strides = [1, 1]} : vector<2x128xf32> to vector<2x32xf32>
    %136 = arith.negf %135 : vector<2x32xf32>
    %137 = math.exp %136 : vector<2x32xf32>
    %cst_42 = arith.constant 1.000000e+00 : f32
    %138 = vector.broadcast %cst_42 : f32 to vector<2x32xf32>
    %139 = arith.addf %138, %137 : vector<2x32xf32>
    %140 = arith.divf %138, %139 : vector<2x32xf32>
    %141 = vector.extract_strided_slice %134 {offsets = [0, 32], sizes = [2, 32], strides = [1, 1]} : vector<2x128xf32> to vector<2x32xf32>
    %142 = arith.negf %141 : vector<2x32xf32>
    %143 = math.exp %142 : vector<2x32xf32>
    %cst_43 = arith.constant 1.000000e+00 : f32
    %144 = vector.broadcast %cst_43 : f32 to vector<2x32xf32>
    %145 = arith.addf %144, %143 : vector<2x32xf32>
    %146 = arith.divf %144, %145 : vector<2x32xf32>
    %147 = vector.extract_strided_slice %134 {offsets = [0, 64], sizes = [2, 32], strides = [1, 1]} : vector<2x128xf32> to vector<2x32xf32>
    %148 = math.tanh %147 : vector<2x32xf32>
    %149 = vector.extract_strided_slice %134 {offsets = [0, 96], sizes = [2, 32], strides = [1, 1]} : vector<2x128xf32> to vector<2x32xf32>
    %150 = arith.negf %149 : vector<2x32xf32>
    %151 = math.exp %150 : vector<2x32xf32>
    %cst_44 = arith.constant 1.000000e+00 : f32
    %152 = vector.broadcast %cst_44 : f32 to vector<2x32xf32>
    %153 = arith.addf %152, %151 : vector<2x32xf32>
    %154 = arith.divf %152, %153 : vector<2x32xf32>
    %155 = arith.mulf %146, %128 : vector<2x32xf32>
    %156 = arith.mulf %140, %148 : vector<2x32xf32>
    %157 = arith.addf %155, %156 : vector<2x32xf32>
    %158 = math.tanh %157 : vector<2x32xf32>
    %159 = arith.mulf %154, %158 : vector<2x32xf32>
    %c8 = arith.constant 8 : index
    %c0_45 = arith.constant 0 : index
    %160 = vector.load %arg11[%c8, %c0_45] : memref<16x32xf32, #tpu.memory_space<vmem>>, vector<2x32xf32>
    tpu.vector_store %arg11[%c8, %c0_45], %159 {strides = array<i32>} : memref<16x32xf32, #tpu.memory_space<vmem>>, vector<2x32xf32>,
    %161 = vector.extract_strided_slice %11 {offsets = [10, 0], sizes = [2, 128], strides = [1, 1]} : vector<16x128xf32> to vector<2x128xf32>
    %cst_46 = arith.constant dense<0.000000e+00> : vector<2x128xf32>
    %162 = tpu.matmul %159, %5, %cst_46 {dimension_numbers = #tpu.dot_dimension_numbers<[1], [0], [0], [1], [0, 0, 1, 1], [], []>} : vector<2x32xf32>, vector<32x128xf32>, vector<2x128xf32> -> vector<2x128xf32>
    %163 = arith.addf %161, %162 : vector<2x128xf32>
    %164 = vector.extract_strided_slice %163 {offsets = [0, 0], sizes = [2, 32], strides = [1, 1]} : vector<2x128xf32> to vector<2x32xf32>
    %165 = arith.negf %164 : vector<2x32xf32>
    %166 = math.exp %165 : vector<2x32xf32>
    %cst_47 = arith.constant 1.000000e+00 : f32
    %167 = vector.broadcast %cst_47 : f32 to vector<2x32xf32>
    %168 = arith.addf %167, %166 : vector<2x32xf32>
    %169 = arith.divf %167, %168 : vector<2x32xf32>
    %170 = vector.extract_strided_slice %163 {offsets = [0, 32], sizes = [2, 32], strides = [1, 1]} : vector<2x128xf32> to vector<2x32xf32>
    %171 = arith.negf %170 : vector<2x32xf32>
    %172 = math.exp %171 : vector<2x32xf32>
    %cst_48 = arith.constant 1.000000e+00 : f32
    %173 = vector.broadcast %cst_48 : f32 to vector<2x32xf32>
    %174 = arith.addf %173, %172 : vector<2x32xf32>
    %175 = arith.divf %173, %174 : vector<2x32xf32>
    %176 = vector.extract_strided_slice %163 {offsets = [0, 64], sizes = [2, 32], strides = [1, 1]} : vector<2x128xf32> to vector<2x32xf32>
    %177 = math.tanh %176 : vector<2x32xf32>
    %178 = vector.extract_strided_slice %163 {offsets = [0, 96], sizes = [2, 32], strides = [1, 1]} : vector<2x128xf32> to vector<2x32xf32>
    %179 = arith.negf %178 : vector<2x32xf32>
    %180 = math.exp %179 : vector<2x32xf32>
    %cst_49 = arith.constant 1.000000e+00 : f32
    %181 = vector.broadcast %cst_49 : f32 to vector<2x32xf32>
    %182 = arith.addf %181, %180 : vector<2x32xf32>
    %183 = arith.divf %181, %182 : vector<2x32xf32>
    %184 = arith.mulf %175, %157 : vector<2x32xf32>
    %185 = arith.mulf %169, %177 : vector<2x32xf32>
    %186 = arith.addf %184, %185 : vector<2x32xf32>
    %187 = math.tanh %186 : vector<2x32xf32>
    %188 = arith.mulf %183, %187 : vector<2x32xf32>
    %c10 = arith.constant 10 : index
    %c0_50 = arith.constant 0 : index
    %189 = vector.load %arg11[%c10, %c0_50] : memref<16x32xf32, #tpu.memory_space<vmem>>, vector<2x32xf32>
    tpu.vector_store %arg11[%c10, %c0_50], %188 {strides = array<i32>} : memref<16x32xf32, #tpu.memory_space<vmem>>, vector<2x32xf32>,
    %190 = vector.extract_strided_slice %11 {offsets = [12, 0], sizes = [2, 128], strides = [1, 1]} : vector<16x128xf32> to vector<2x128xf32>
    %cst_51 = arith.constant dense<0.000000e+00> : vector<2x128xf32>
    %191 = tpu.matmul %188, %5, %cst_51 {dimension_numbers = #tpu.dot_dimension_numbers<[1], [0], [0], [1], [0, 0, 1, 1], [], []>} : vector<2x32xf32>, vector<32x128xf32>, vector<2x128xf32> -> vector<2x128xf32>
    %192 = arith.addf %190, %191 : vector<2x128xf32>
    %193 = vector.extract_strided_slice %192 {offsets = [0, 0], sizes = [2, 32], strides = [1, 1]} : vector<2x128xf32> to vector<2x32xf32>
    %194 = arith.negf %193 : vector<2x32xf32>
    %195 = math.exp %194 : vector<2x32xf32>
    %cst_52 = arith.constant 1.000000e+00 : f32
    %196 = vector.broadcast %cst_52 : f32 to vector<2x32xf32>
    %197 = arith.addf %196, %195 : vector<2x32xf32>
    %198 = arith.divf %196, %197 : vector<2x32xf32>
    %199 = vector.extract_strided_slice %192 {offsets = [0, 32], sizes = [2, 32], strides = [1, 1]} : vector<2x128xf32> to vector<2x32xf32>
    %200 = arith.negf %199 : vector<2x32xf32>
    %201 = math.exp %200 : vector<2x32xf32>
    %cst_53 = arith.constant 1.000000e+00 : f32
    %202 = vector.broadcast %cst_53 : f32 to vector<2x32xf32>
    %203 = arith.addf %202, %201 : vector<2x32xf32>
    %204 = arith.divf %202, %203 : vector<2x32xf32>
    %205 = vector.extract_strided_slice %192 {offsets = [0, 64], sizes = [2, 32], strides = [1, 1]} : vector<2x128xf32> to vector<2x32xf32>
    %206 = math.tanh %205 : vector<2x32xf32>
    %207 = vector.extract_strided_slice %192 {offsets = [0, 96], sizes = [2, 32], strides = [1, 1]} : vector<2x128xf32> to vector<2x32xf32>
    %208 = arith.negf %207 : vector<2x32xf32>
    %209 = math.exp %208 : vector<2x32xf32>
    %cst_54 = arith.constant 1.000000e+00 : f32
    %210 = vector.broadcast %cst_54 : f32 to vector<2x32xf32>
    %211 = arith.addf %210, %209 : vector<2x32xf32>
    %212 = arith.divf %210, %211 : vector<2x32xf32>
    %213 = arith.mulf %204, %186 : vector<2x32xf32>
    %214 = arith.mulf %198, %206 : vector<2x32xf32>
    %215 = arith.addf %213, %214 : vector<2x32xf32>
    %216 = math.tanh %215 : vector<2x32xf32>
    %217 = arith.mulf %212, %216 : vector<2x32xf32>
    %c12 = arith.constant 12 : index
    %c0_55 = arith.constant 0 : index
    %218 = vector.load %arg11[%c12, %c0_55] : memref<16x32xf32, #tpu.memory_space<vmem>>, vector<2x32xf32>
    tpu.vector_store %arg11[%c12, %c0_55], %217 {strides = array<i32>} : memref<16x32xf32, #tpu.memory_space<vmem>>, vector<2x32xf32>,
    %219 = vector.extract_strided_slice %11 {offsets = [14, 0], sizes = [2, 128], strides = [1, 1]} : vector<16x128xf32> to vector<2x128xf32>
    %cst_56 = arith.constant dense<0.000000e+00> : vector<2x128xf32>
    %220 = tpu.matmul %217, %5, %cst_56 {dimension_numbers = #tpu.dot_dimension_numbers<[1], [0], [0], [1], [0, 0, 1, 1], [], []>} : vector<2x32xf32>, vector<32x128xf32>, vector<2x128xf32> -> vector<2x128xf32>
    %221 = arith.addf %219, %220 : vector<2x128xf32>
    %222 = vector.extract_strided_slice %221 {offsets = [0, 0], sizes = [2, 32], strides = [1, 1]} : vector<2x128xf32> to vector<2x32xf32>
    %223 = arith.negf %222 : vector<2x32xf32>
    %224 = math.exp %223 : vector<2x32xf32>
    %cst_57 = arith.constant 1.000000e+00 : f32
    %225 = vector.broadcast %cst_57 : f32 to vector<2x32xf32>
    %226 = arith.addf %225, %224 : vector<2x32xf32>
    %227 = arith.divf %225, %226 : vector<2x32xf32>
    %228 = vector.extract_strided_slice %221 {offsets = [0, 32], sizes = [2, 32], strides = [1, 1]} : vector<2x128xf32> to vector<2x32xf32>
    %229 = arith.negf %228 : vector<2x32xf32>
    %230 = math.exp %229 : vector<2x32xf32>
    %cst_58 = arith.constant 1.000000e+00 : f32
    %231 = vector.broadcast %cst_58 : f32 to vector<2x32xf32>
    %232 = arith.addf %231, %230 : vector<2x32xf32>
    %233 = arith.divf %231, %232 : vector<2x32xf32>
    %234 = vector.extract_strided_slice %221 {offsets = [0, 64], sizes = [2, 32], strides = [1, 1]} : vector<2x128xf32> to vector<2x32xf32>
    %235 = math.tanh %234 : vector<2x32xf32>
    %236 = vector.extract_strided_slice %221 {offsets = [0, 96], sizes = [2, 32], strides = [1, 1]} : vector<2x128xf32> to vector<2x32xf32>
    %237 = arith.negf %236 : vector<2x32xf32>
    %238 = math.exp %237 : vector<2x32xf32>
    %cst_59 = arith.constant 1.000000e+00 : f32
    %239 = vector.broadcast %cst_59 : f32 to vector<2x32xf32>
    %240 = arith.addf %239, %238 : vector<2x32xf32>
    %241 = arith.divf %239, %240 : vector<2x32xf32>
    %242 = arith.mulf %233, %215 : vector<2x32xf32>
    %243 = arith.mulf %227, %235 : vector<2x32xf32>
    %244 = arith.addf %242, %243 : vector<2x32xf32>
    %245 = math.tanh %244 : vector<2x32xf32>
    %246 = arith.mulf %241, %245 : vector<2x32xf32>
    %c14 = arith.constant 14 : index
    %c0_60 = arith.constant 0 : index
    %247 = vector.load %arg11[%c14, %c0_60] : memref<16x32xf32, #tpu.memory_space<vmem>>, vector<2x32xf32>
    tpu.vector_store %arg11[%c14, %c0_60], %246 {strides = array<i32>} : memref<16x32xf32, #tpu.memory_space<vmem>>, vector<2x32xf32>,
    %c0_61 = arith.constant 0 : index
    %c0_62 = arith.constant 0 : index
    %c0_63 = arith.constant 0 : index
    %248 = vector.load %arg9[%c0_61, %c0_62, %c0_63] : memref<2x2x32xf32, #tpu.memory_space<vmem>>, vector<1x2x32xf32>
    %249 = vector.shape_cast %248 : vector<1x2x32xf32> to vector<2x32xf32>
    %250 = vector.shape_cast %246 : vector<2x32xf32> to vector<1x2x32xf32>
    tpu.vector_store %arg9[%c0_61, %c0_62, %c0_63], %250 {strides = array<i32>} : memref<2x2x32xf32, #tpu.memory_space<vmem>>, vector<1x2x32xf32>,
    %c0_64 = arith.constant 0 : index
    %c0_65 = arith.constant 0 : index
    %c0_66 = arith.constant 0 : index
    %251 = vector.load %arg10[%c0_64, %c0_65, %c0_66] : memref<2x2x32xf32, #tpu.memory_space<vmem>>, vector<1x2x32xf32>
    %252 = vector.shape_cast %251 : vector<1x2x32xf32> to vector<2x32xf32>
    %253 = vector.shape_cast %244 : vector<2x32xf32> to vector<1x2x32xf32>
    tpu.vector_store %arg10[%c0_64, %c0_65, %c0_66], %253 {strides = array<i32>} : memref<2x2x32xf32, #tpu.memory_space<vmem>>, vector<1x2x32xf32>,
    %c1 = arith.constant 1 : index
    %c0_67 = arith.constant 0 : index
    %c0_68 = arith.constant 0 : index
    %254 = vector.load %arg3[%c1, %c0_67, %c0_68] : memref<2x32x128xf32, #tpu.memory_space<vmem>>, vector<1x32x128xf32>
    %255 = vector.shape_cast %254 : vector<1x32x128xf32> to vector<32x128xf32>
    %c1_69 = arith.constant 1 : index
    %c0_70 = arith.constant 0 : index
    %c0_71 = arith.constant 0 : index
    %256 = vector.load %arg4[%c1_69, %c0_70, %c0_71] : memref<2x32x128xf32, #tpu.memory_space<vmem>>, vector<1x32x128xf32>
    %257 = vector.shape_cast %256 : vector<1x32x128xf32> to vector<32x128xf32>
    %c1_72 = arith.constant 1 : index
    %c0_73 = arith.constant 0 : index
    %c0_74 = arith.constant 0 : index
    %258 = vector.load %arg5[%c1_72, %c0_73, %c0_74] : memref<2x1x128xf32, #tpu.memory_space<vmem>>, vector<1x1x128xf32>
    %259 = vector.shape_cast %258 : vector<1x1x128xf32> to vector<1x128xf32>
    %c0_75 = arith.constant 0 : index
    %c0_76 = arith.constant 0 : index
    %260 = vector.load %arg11[%c0_75, %c0_76] : memref<16x32xf32, #tpu.memory_space<vmem>>, vector<16x32xf32>
    %cst_77 = arith.constant dense<0.000000e+00> : vector<16x128xf32>
    %261 = tpu.matmul %260, %255, %cst_77 {dimension_numbers = #tpu.dot_dimension_numbers<[1], [0], [0], [1], [0, 0, 1, 1], [], []>} : vector<16x32xf32>, vector<32x128xf32>, vector<16x128xf32> -> vector<16x128xf32>
    %262 = vector.broadcast %259 : vector<1x128xf32> to vector<16x128xf32>
    %263 = arith.addf %261, %262 : vector<16x128xf32>
    %c1_78 = arith.constant 1 : index
    %c0_79 = arith.constant 0 : index
    %c0_80 = arith.constant 0 : index
    %264 = vector.load %arg1[%c1_78, %c0_79, %c0_80] : memref<2x2x32xf32, #tpu.memory_space<vmem>>, vector<1x2x32xf32>
    %265 = vector.shape_cast %264 : vector<1x2x32xf32> to vector<2x32xf32>
    %c1_81 = arith.constant 1 : index
    %c0_82 = arith.constant 0 : index
    %c0_83 = arith.constant 0 : index
    %266 = vector.load %arg2[%c1_81, %c0_82, %c0_83] : memref<2x2x32xf32, #tpu.memory_space<vmem>>, vector<1x2x32xf32>
    %267 = vector.shape_cast %266 : vector<1x2x32xf32> to vector<2x32xf32>
    %268 = vector.extract_strided_slice %263 {offsets = [0, 0], sizes = [2, 128], strides = [1, 1]} : vector<16x128xf32> to vector<2x128xf32>
    %cst_84 = arith.constant dense<0.000000e+00> : vector<2x128xf32>
    %269 = tpu.matmul %265, %257, %cst_84 {dimension_numbers = #tpu.dot_dimension_numbers<[1], [0], [0], [1], [0, 0, 1, 1], [], []>} : vector<2x32xf32>, vector<32x128xf32>, vector<2x128xf32> -> vector<2x128xf32>
    %270 = arith.addf %268, %269 : vector<2x128xf32>
    %271 = vector.extract_strided_slice %270 {offsets = [0, 0], sizes = [2, 32], strides = [1, 1]} : vector<2x128xf32> to vector<2x32xf32>
    %272 = arith.negf %271 : vector<2x32xf32>
    %273 = math.exp %272 : vector<2x32xf32>
    %cst_85 = arith.constant 1.000000e+00 : f32
    %274 = vector.broadcast %cst_85 : f32 to vector<2x32xf32>
    %275 = arith.addf %274, %273 : vector<2x32xf32>
    %276 = arith.divf %274, %275 : vector<2x32xf32>
    %277 = vector.extract_strided_slice %270 {offsets = [0, 32], sizes = [2, 32], strides = [1, 1]} : vector<2x128xf32> to vector<2x32xf32>
    %278 = arith.negf %277 : vector<2x32xf32>
    %279 = math.exp %278 : vector<2x32xf32>
    %cst_86 = arith.constant 1.000000e+00 : f32
    %280 = vector.broadcast %cst_86 : f32 to vector<2x32xf32>
    %281 = arith.addf %280, %279 : vector<2x32xf32>
    %282 = arith.divf %280, %281 : vector<2x32xf32>
    %283 = vector.extract_strided_slice %270 {offsets = [0, 64], sizes = [2, 32], strides = [1, 1]} : vector<2x128xf32> to vector<2x32xf32>
    %284 = math.tanh %283 : vector<2x32xf32>
    %285 = vector.extract_strided_slice %270 {offsets = [0, 96], sizes = [2, 32], strides = [1, 1]} : vector<2x128xf32> to vector<2x32xf32>
    %286 = arith.negf %285 : vector<2x32xf32>
    %287 = math.exp %286 : vector<2x32xf32>
    %cst_87 = arith.constant 1.000000e+00 : f32
    %288 = vector.broadcast %cst_87 : f32 to vector<2x32xf32>
    %289 = arith.addf %288, %287 : vector<2x32xf32>
    %290 = arith.divf %288, %289 : vector<2x32xf32>
    %291 = arith.mulf %282, %267 : vector<2x32xf32>
    %292 = arith.mulf %276, %284 : vector<2x32xf32>
    %293 = arith.addf %291, %292 : vector<2x32xf32>
    %294 = math.tanh %293 : vector<2x32xf32>
    %295 = arith.mulf %290, %294 : vector<2x32xf32>
    %c0_88 = arith.constant 0 : index
    %c0_89 = arith.constant 0 : index
    %296 = vector.load %arg11[%c0_88, %c0_89] : memref<16x32xf32, #tpu.memory_space<vmem>>, vector<2x32xf32>
    tpu.vector_store %arg11[%c0_88, %c0_89], %295 {strides = array<i32>} : memref<16x32xf32, #tpu.memory_space<vmem>>, vector<2x32xf32>,
    %297 = vector.extract_strided_slice %263 {offsets = [2, 0], sizes = [2, 128], strides = [1, 1]} : vector<16x128xf32> to vector<2x128xf32>
    %cst_90 = arith.constant dense<0.000000e+00> : vector<2x128xf32>
    %298 = tpu.matmul %295, %257, %cst_90 {dimension_numbers = #tpu.dot_dimension_numbers<[1], [0], [0], [1], [0, 0, 1, 1], [], []>} : vector<2x32xf32>, vector<32x128xf32>, vector<2x128xf32> -> vector<2x128xf32>
    %299 = arith.addf %297, %298 : vector<2x128xf32>
    %300 = vector.extract_strided_slice %299 {offsets = [0, 0], sizes = [2, 32], strides = [1, 1]} : vector<2x128xf32> to vector<2x32xf32>
    %301 = arith.negf %300 : vector<2x32xf32>
    %302 = math.exp %301 : vector<2x32xf32>
    %cst_91 = arith.constant 1.000000e+00 : f32
    %303 = vector.broadcast %cst_91 : f32 to vector<2x32xf32>
    %304 = arith.addf %303, %302 : vector<2x32xf32>
    %305 = arith.divf %303, %304 : vector<2x32xf32>
    %306 = vector.extract_strided_slice %299 {offsets = [0, 32], sizes = [2, 32], strides = [1, 1]} : vector<2x128xf32> to vector<2x32xf32>
    %307 = arith.negf %306 : vector<2x32xf32>
    %308 = math.exp %307 : vector<2x32xf32>
    %cst_92 = arith.constant 1.000000e+00 : f32
    %309 = vector.broadcast %cst_92 : f32 to vector<2x32xf32>
    %310 = arith.addf %309, %308 : vector<2x32xf32>
    %311 = arith.divf %309, %310 : vector<2x32xf32>
    %312 = vector.extract_strided_slice %299 {offsets = [0, 64], sizes = [2, 32], strides = [1, 1]} : vector<2x128xf32> to vector<2x32xf32>
    %313 = math.tanh %312 : vector<2x32xf32>
    %314 = vector.extract_strided_slice %299 {offsets = [0, 96], sizes = [2, 32], strides = [1, 1]} : vector<2x128xf32> to vector<2x32xf32>
    %315 = arith.negf %314 : vector<2x32xf32>
    %316 = math.exp %315 : vector<2x32xf32>
    %cst_93 = arith.constant 1.000000e+00 : f32
    %317 = vector.broadcast %cst_93 : f32 to vector<2x32xf32>
    %318 = arith.addf %317, %316 : vector<2x32xf32>
    %319 = arith.divf %317, %318 : vector<2x32xf32>
    %320 = arith.mulf %311, %293 : vector<2x32xf32>
    %321 = arith.mulf %305, %313 : vector<2x32xf32>
    %322 = arith.addf %320, %321 : vector<2x32xf32>
    %323 = math.tanh %322 : vector<2x32xf32>
    %324 = arith.mulf %319, %323 : vector<2x32xf32>
    %c2_94 = arith.constant 2 : index
    %c0_95 = arith.constant 0 : index
    %325 = vector.load %arg11[%c2_94, %c0_95] : memref<16x32xf32, #tpu.memory_space<vmem>>, vector<2x32xf32>
    tpu.vector_store %arg11[%c2_94, %c0_95], %324 {strides = array<i32>} : memref<16x32xf32, #tpu.memory_space<vmem>>, vector<2x32xf32>,
    %326 = vector.extract_strided_slice %263 {offsets = [4, 0], sizes = [2, 128], strides = [1, 1]} : vector<16x128xf32> to vector<2x128xf32>
    %cst_96 = arith.constant dense<0.000000e+00> : vector<2x128xf32>
    %327 = tpu.matmul %324, %257, %cst_96 {dimension_numbers = #tpu.dot_dimension_numbers<[1], [0], [0], [1], [0, 0, 1, 1], [], []>} : vector<2x32xf32>, vector<32x128xf32>, vector<2x128xf32> -> vector<2x128xf32>
    %328 = arith.addf %326, %327 : vector<2x128xf32>
    %329 = vector.extract_strided_slice %328 {offsets = [0, 0], sizes = [2, 32], strides = [1, 1]} : vector<2x128xf32> to vector<2x32xf32>
    %330 = arith.negf %329 : vector<2x32xf32>
    %331 = math.exp %330 : vector<2x32xf32>
    %cst_97 = arith.constant 1.000000e+00 : f32
    %332 = vector.broadcast %cst_97 : f32 to vector<2x32xf32>
    %333 = arith.addf %332, %331 : vector<2x32xf32>
    %334 = arith.divf %332, %333 : vector<2x32xf32>
    %335 = vector.extract_strided_slice %328 {offsets = [0, 32], sizes = [2, 32], strides = [1, 1]} : vector<2x128xf32> to vector<2x32xf32>
    %336 = arith.negf %335 : vector<2x32xf32>
    %337 = math.exp %336 : vector<2x32xf32>
    %cst_98 = arith.constant 1.000000e+00 : f32
    %338 = vector.broadcast %cst_98 : f32 to vector<2x32xf32>
    %339 = arith.addf %338, %337 : vector<2x32xf32>
    %340 = arith.divf %338, %339 : vector<2x32xf32>
    %341 = vector.extract_strided_slice %328 {offsets = [0, 64], sizes = [2, 32], strides = [1, 1]} : vector<2x128xf32> to vector<2x32xf32>
    %342 = math.tanh %341 : vector<2x32xf32>
    %343 = vector.extract_strided_slice %328 {offsets = [0, 96], sizes = [2, 32], strides = [1, 1]} : vector<2x128xf32> to vector<2x32xf32>
    %344 = arith.negf %343 : vector<2x32xf32>
    %345 = math.exp %344 : vector<2x32xf32>
    %cst_99 = arith.constant 1.000000e+00 : f32
    %346 = vector.broadcast %cst_99 : f32 to vector<2x32xf32>
    %347 = arith.addf %346, %345 : vector<2x32xf32>
    %348 = arith.divf %346, %347 : vector<2x32xf32>
    %349 = arith.mulf %340, %322 : vector<2x32xf32>
    %350 = arith.mulf %334, %342 : vector<2x32xf32>
    %351 = arith.addf %349, %350 : vector<2x32xf32>
    %352 = math.tanh %351 : vector<2x32xf32>
    %353 = arith.mulf %348, %352 : vector<2x32xf32>
    %c4_100 = arith.constant 4 : index
    %c0_101 = arith.constant 0 : index
    %354 = vector.load %arg11[%c4_100, %c0_101] : memref<16x32xf32, #tpu.memory_space<vmem>>, vector<2x32xf32>
    tpu.vector_store %arg11[%c4_100, %c0_101], %353 {strides = array<i32>} : memref<16x32xf32, #tpu.memory_space<vmem>>, vector<2x32xf32>,
    %355 = vector.extract_strided_slice %263 {offsets = [6, 0], sizes = [2, 128], strides = [1, 1]} : vector<16x128xf32> to vector<2x128xf32>
    %cst_102 = arith.constant dense<0.000000e+00> : vector<2x128xf32>
    %356 = tpu.matmul %353, %257, %cst_102 {dimension_numbers = #tpu.dot_dimension_numbers<[1], [0], [0], [1], [0, 0, 1, 1], [], []>} : vector<2x32xf32>, vector<32x128xf32>, vector<2x128xf32> -> vector<2x128xf32>
    %357 = arith.addf %355, %356 : vector<2x128xf32>
    %358 = vector.extract_strided_slice %357 {offsets = [0, 0], sizes = [2, 32], strides = [1, 1]} : vector<2x128xf32> to vector<2x32xf32>
    %359 = arith.negf %358 : vector<2x32xf32>
    %360 = math.exp %359 : vector<2x32xf32>
    %cst_103 = arith.constant 1.000000e+00 : f32
    %361 = vector.broadcast %cst_103 : f32 to vector<2x32xf32>
    %362 = arith.addf %361, %360 : vector<2x32xf32>
    %363 = arith.divf %361, %362 : vector<2x32xf32>
    %364 = vector.extract_strided_slice %357 {offsets = [0, 32], sizes = [2, 32], strides = [1, 1]} : vector<2x128xf32> to vector<2x32xf32>
    %365 = arith.negf %364 : vector<2x32xf32>
    %366 = math.exp %365 : vector<2x32xf32>
    %cst_104 = arith.constant 1.000000e+00 : f32
    %367 = vector.broadcast %cst_104 : f32 to vector<2x32xf32>
    %368 = arith.addf %367, %366 : vector<2x32xf32>
    %369 = arith.divf %367, %368 : vector<2x32xf32>
    %370 = vector.extract_strided_slice %357 {offsets = [0, 64], sizes = [2, 32], strides = [1, 1]} : vector<2x128xf32> to vector<2x32xf32>
    %371 = math.tanh %370 : vector<2x32xf32>
    %372 = vector.extract_strided_slice %357 {offsets = [0, 96], sizes = [2, 32], strides = [1, 1]} : vector<2x128xf32> to vector<2x32xf32>
    %373 = arith.negf %372 : vector<2x32xf32>
    %374 = math.exp %373 : vector<2x32xf32>
    %cst_105 = arith.constant 1.000000e+00 : f32
    %375 = vector.broadcast %cst_105 : f32 to vector<2x32xf32>
    %376 = arith.addf %375, %374 : vector<2x32xf32>
    %377 = arith.divf %375, %376 : vector<2x32xf32>
    %378 = arith.mulf %369, %351 : vector<2x32xf32>
    %379 = arith.mulf %363, %371 : vector<2x32xf32>
    %380 = arith.addf %378, %379 : vector<2x32xf32>
    %381 = math.tanh %380 : vector<2x32xf32>
    %382 = arith.mulf %377, %381 : vector<2x32xf32>
    %c6_106 = arith.constant 6 : index
    %c0_107 = arith.constant 0 : index
    %383 = vector.load %arg11[%c6_106, %c0_107] : memref<16x32xf32, #tpu.memory_space<vmem>>, vector<2x32xf32>
    tpu.vector_store %arg11[%c6_106, %c0_107], %382 {strides = array<i32>} : memref<16x32xf32, #tpu.memory_space<vmem>>, vector<2x32xf32>,
    %384 = vector.extract_strided_slice %263 {offsets = [8, 0], sizes = [2, 128], strides = [1, 1]} : vector<16x128xf32> to vector<2x128xf32>
    %cst_108 = arith.constant dense<0.000000e+00> : vector<2x128xf32>
    %385 = tpu.matmul %382, %257, %cst_108 {dimension_numbers = #tpu.dot_dimension_numbers<[1], [0], [0], [1], [0, 0, 1, 1], [], []>} : vector<2x32xf32>, vector<32x128xf32>, vector<2x128xf32> -> vector<2x128xf32>
    %386 = arith.addf %384, %385 : vector<2x128xf32>
    %387 = vector.extract_strided_slice %386 {offsets = [0, 0], sizes = [2, 32], strides = [1, 1]} : vector<2x128xf32> to vector<2x32xf32>
    %388 = arith.negf %387 : vector<2x32xf32>
    %389 = math.exp %388 : vector<2x32xf32>
    %cst_109 = arith.constant 1.000000e+00 : f32
    %390 = vector.broadcast %cst_109 : f32 to vector<2x32xf32>
    %391 = arith.addf %390, %389 : vector<2x32xf32>
    %392 = arith.divf %390, %391 : vector<2x32xf32>
    %393 = vector.extract_strided_slice %386 {offsets = [0, 32], sizes = [2, 32], strides = [1, 1]} : vector<2x128xf32> to vector<2x32xf32>
    %394 = arith.negf %393 : vector<2x32xf32>
    %395 = math.exp %394 : vector<2x32xf32>
    %cst_110 = arith.constant 1.000000e+00 : f32
    %396 = vector.broadcast %cst_110 : f32 to vector<2x32xf32>
    %397 = arith.addf %396, %395 : vector<2x32xf32>
    %398 = arith.divf %396, %397 : vector<2x32xf32>
    %399 = vector.extract_strided_slice %386 {offsets = [0, 64], sizes = [2, 32], strides = [1, 1]} : vector<2x128xf32> to vector<2x32xf32>
    %400 = math.tanh %399 : vector<2x32xf32>
    %401 = vector.extract_strided_slice %386 {offsets = [0, 96], sizes = [2, 32], strides = [1, 1]} : vector<2x128xf32> to vector<2x32xf32>
    %402 = arith.negf %401 : vector<2x32xf32>
    %403 = math.exp %402 : vector<2x32xf32>
    %cst_111 = arith.constant 1.000000e+00 : f32
    %404 = vector.broadcast %cst_111 : f32 to vector<2x32xf32>
    %405 = arith.addf %404, %403 : vector<2x32xf32>
    %406 = arith.divf %404, %405 : vector<2x32xf32>
    %407 = arith.mulf %398, %380 : vector<2x32xf32>
    %408 = arith.mulf %392, %400 : vector<2x32xf32>
    %409 = arith.addf %407, %408 : vector<2x32xf32>
    %410 = math.tanh %409 : vector<2x32xf32>
    %411 = arith.mulf %406, %410 : vector<2x32xf32>
    %c8_112 = arith.constant 8 : index
    %c0_113 = arith.constant 0 : index
    %412 = vector.load %arg11[%c8_112, %c0_113] : memref<16x32xf32, #tpu.memory_space<vmem>>, vector<2x32xf32>
    tpu.vector_store %arg11[%c8_112, %c0_113], %411 {strides = array<i32>} : memref<16x32xf32, #tpu.memory_space<vmem>>, vector<2x32xf32>,
    %413 = vector.extract_strided_slice %263 {offsets = [10, 0], sizes = [2, 128], strides = [1, 1]} : vector<16x128xf32> to vector<2x128xf32>
    %cst_114 = arith.constant dense<0.000000e+00> : vector<2x128xf32>
    %414 = tpu.matmul %411, %257, %cst_114 {dimension_numbers = #tpu.dot_dimension_numbers<[1], [0], [0], [1], [0, 0, 1, 1], [], []>} : vector<2x32xf32>, vector<32x128xf32>, vector<2x128xf32> -> vector<2x128xf32>
    %415 = arith.addf %413, %414 : vector<2x128xf32>
    %416 = vector.extract_strided_slice %415 {offsets = [0, 0], sizes = [2, 32], strides = [1, 1]} : vector<2x128xf32> to vector<2x32xf32>
    %417 = arith.negf %416 : vector<2x32xf32>
    %418 = math.exp %417 : vector<2x32xf32>
    %cst_115 = arith.constant 1.000000e+00 : f32
    %419 = vector.broadcast %cst_115 : f32 to vector<2x32xf32>
    %420 = arith.addf %419, %418 : vector<2x32xf32>
    %421 = arith.divf %419, %420 : vector<2x32xf32>
    %422 = vector.extract_strided_slice %415 {offsets = [0, 32], sizes = [2, 32], strides = [1, 1]} : vector<2x128xf32> to vector<2x32xf32>
    %423 = arith.negf %422 : vector<2x32xf32>
    %424 = math.exp %423 : vector<2x32xf32>
    %cst_116 = arith.constant 1.000000e+00 : f32
    %425 = vector.broadcast %cst_116 : f32 to vector<2x32xf32>
    %426 = arith.addf %425, %424 : vector<2x32xf32>
    %427 = arith.divf %425, %426 : vector<2x32xf32>
    %428 = vector.extract_strided_slice %415 {offsets = [0, 64], sizes = [2, 32], strides = [1, 1]} : vector<2x128xf32> to vector<2x32xf32>
    %429 = math.tanh %428 : vector<2x32xf32>
    %430 = vector.extract_strided_slice %415 {offsets = [0, 96], sizes = [2, 32], strides = [1, 1]} : vector<2x128xf32> to vector<2x32xf32>
    %431 = arith.negf %430 : vector<2x32xf32>
    %432 = math.exp %431 : vector<2x32xf32>
    %cst_117 = arith.constant 1.000000e+00 : f32
    %433 = vector.broadcast %cst_117 : f32 to vector<2x32xf32>
    %434 = arith.addf %433, %432 : vector<2x32xf32>
    %435 = arith.divf %433, %434 : vector<2x32xf32>
    %436 = arith.mulf %427, %409 : vector<2x32xf32>
    %437 = arith.mulf %421, %429 : vector<2x32xf32>
    %438 = arith.addf %436, %437 : vector<2x32xf32>
    %439 = math.tanh %438 : vector<2x32xf32>
    %440 = arith.mulf %435, %439 : vector<2x32xf32>
    %c10_118 = arith.constant 10 : index
    %c0_119 = arith.constant 0 : index
    %441 = vector.load %arg11[%c10_118, %c0_119] : memref<16x32xf32, #tpu.memory_space<vmem>>, vector<2x32xf32>
    tpu.vector_store %arg11[%c10_118, %c0_119], %440 {strides = array<i32>} : memref<16x32xf32, #tpu.memory_space<vmem>>, vector<2x32xf32>,
    %442 = vector.extract_strided_slice %263 {offsets = [12, 0], sizes = [2, 128], strides = [1, 1]} : vector<16x128xf32> to vector<2x128xf32>
    %cst_120 = arith.constant dense<0.000000e+00> : vector<2x128xf32>
    %443 = tpu.matmul %440, %257, %cst_120 {dimension_numbers = #tpu.dot_dimension_numbers<[1], [0], [0], [1], [0, 0, 1, 1], [], []>} : vector<2x32xf32>, vector<32x128xf32>, vector<2x128xf32> -> vector<2x128xf32>
    %444 = arith.addf %442, %443 : vector<2x128xf32>
    %445 = vector.extract_strided_slice %444 {offsets = [0, 0], sizes = [2, 32], strides = [1, 1]} : vector<2x128xf32> to vector<2x32xf32>
    %446 = arith.negf %445 : vector<2x32xf32>
    %447 = math.exp %446 : vector<2x32xf32>
    %cst_121 = arith.constant 1.000000e+00 : f32
    %448 = vector.broadcast %cst_121 : f32 to vector<2x32xf32>
    %449 = arith.addf %448, %447 : vector<2x32xf32>
    %450 = arith.divf %448, %449 : vector<2x32xf32>
    %451 = vector.extract_strided_slice %444 {offsets = [0, 32], sizes = [2, 32], strides = [1, 1]} : vector<2x128xf32> to vector<2x32xf32>
    %452 = arith.negf %451 : vector<2x32xf32>
    %453 = math.exp %452 : vector<2x32xf32>
    %cst_122 = arith.constant 1.000000e+00 : f32
    %454 = vector.broadcast %cst_122 : f32 to vector<2x32xf32>
    %455 = arith.addf %454, %453 : vector<2x32xf32>
    %456 = arith.divf %454, %455 : vector<2x32xf32>
    %457 = vector.extract_strided_slice %444 {offsets = [0, 64], sizes = [2, 32], strides = [1, 1]} : vector<2x128xf32> to vector<2x32xf32>
    %458 = math.tanh %457 : vector<2x32xf32>
    %459 = vector.extract_strided_slice %444 {offsets = [0, 96], sizes = [2, 32], strides = [1, 1]} : vector<2x128xf32> to vector<2x32xf32>
    %460 = arith.negf %459 : vector<2x32xf32>
    %461 = math.exp %460 : vector<2x32xf32>
    %cst_123 = arith.constant 1.000000e+00 : f32
    %462 = vector.broadcast %cst_123 : f32 to vector<2x32xf32>
    %463 = arith.addf %462, %461 : vector<2x32xf32>
    %464 = arith.divf %462, %463 : vector<2x32xf32>
    %465 = arith.mulf %456, %438 : vector<2x32xf32>
    %466 = arith.mulf %450, %458 : vector<2x32xf32>
    %467 = arith.addf %465, %466 : vector<2x32xf32>
    %468 = math.tanh %467 : vector<2x32xf32>
    %469 = arith.mulf %464, %468 : vector<2x32xf32>
    %c12_124 = arith.constant 12 : index
    %c0_125 = arith.constant 0 : index
    %470 = vector.load %arg11[%c12_124, %c0_125] : memref<16x32xf32, #tpu.memory_space<vmem>>, vector<2x32xf32>
    tpu.vector_store %arg11[%c12_124, %c0_125], %469 {strides = array<i32>} : memref<16x32xf32, #tpu.memory_space<vmem>>, vector<2x32xf32>,
    %471 = vector.extract_strided_slice %263 {offsets = [14, 0], sizes = [2, 128], strides = [1, 1]} : vector<16x128xf32> to vector<2x128xf32>
    %cst_126 = arith.constant dense<0.000000e+00> : vector<2x128xf32>
    %472 = tpu.matmul %469, %257, %cst_126 {dimension_numbers = #tpu.dot_dimension_numbers<[1], [0], [0], [1], [0, 0, 1, 1], [], []>} : vector<2x32xf32>, vector<32x128xf32>, vector<2x128xf32> -> vector<2x128xf32>
    %473 = arith.addf %471, %472 : vector<2x128xf32>
    %474 = vector.extract_strided_slice %473 {offsets = [0, 0], sizes = [2, 32], strides = [1, 1]} : vector<2x128xf32> to vector<2x32xf32>
    %475 = arith.negf %474 : vector<2x32xf32>
    %476 = math.exp %475 : vector<2x32xf32>
    %cst_127 = arith.constant 1.000000e+00 : f32
    %477 = vector.broadcast %cst_127 : f32 to vector<2x32xf32>
    %478 = arith.addf %477, %476 : vector<2x32xf32>
    %479 = arith.divf %477, %478 : vector<2x32xf32>
    %480 = vector.extract_strided_slice %473 {offsets = [0, 32], sizes = [2, 32], strides = [1, 1]} : vector<2x128xf32> to vector<2x32xf32>
    %481 = arith.negf %480 : vector<2x32xf32>
    %482 = math.exp %481 : vector<2x32xf32>
    %cst_128 = arith.constant 1.000000e+00 : f32
    %483 = vector.broadcast %cst_128 : f32 to vector<2x32xf32>
    %484 = arith.addf %483, %482 : vector<2x32xf32>
    %485 = arith.divf %483, %484 : vector<2x32xf32>
    %486 = vector.extract_strided_slice %473 {offsets = [0, 64], sizes = [2, 32], strides = [1, 1]} : vector<2x128xf32> to vector<2x32xf32>
    %487 = math.tanh %486 : vector<2x32xf32>
    %488 = vector.extract_strided_slice %473 {offsets = [0, 96], sizes = [2, 32], strides = [1, 1]} : vector<2x128xf32> to vector<2x32xf32>
    %489 = arith.negf %488 : vector<2x32xf32>
    %490 = math.exp %489 : vector<2x32xf32>
    %cst_129 = arith.constant 1.000000e+00 : f32
    %491 = vector.broadcast %cst_129 : f32 to vector<2x32xf32>
    %492 = arith.addf %491, %490 : vector<2x32xf32>
    %493 = arith.divf %491, %492 : vector<2x32xf32>
    %494 = arith.mulf %485, %467 : vector<2x32xf32>
    %495 = arith.mulf %479, %487 : vector<2x32xf32>
    %496 = arith.addf %494, %495 : vector<2x32xf32>
    %497 = math.tanh %496 : vector<2x32xf32>
    %498 = arith.mulf %493, %497 : vector<2x32xf32>
    %c14_130 = arith.constant 14 : index
    %c0_131 = arith.constant 0 : index
    %499 = vector.load %arg11[%c14_130, %c0_131] : memref<16x32xf32, #tpu.memory_space<vmem>>, vector<2x32xf32>
    tpu.vector_store %arg11[%c14_130, %c0_131], %498 {strides = array<i32>} : memref<16x32xf32, #tpu.memory_space<vmem>>, vector<2x32xf32>,
    %c1_132 = arith.constant 1 : index
    %c0_133 = arith.constant 0 : index
    %c0_134 = arith.constant 0 : index
    %500 = vector.load %arg9[%c1_132, %c0_133, %c0_134] : memref<2x2x32xf32, #tpu.memory_space<vmem>>, vector<1x2x32xf32>
    %501 = vector.shape_cast %500 : vector<1x2x32xf32> to vector<2x32xf32>
    %502 = vector.shape_cast %498 : vector<2x32xf32> to vector<1x2x32xf32>
    tpu.vector_store %arg9[%c1_132, %c0_133, %c0_134], %502 {strides = array<i32>} : memref<2x2x32xf32, #tpu.memory_space<vmem>>, vector<1x2x32xf32>,
    %c1_135 = arith.constant 1 : index
    %c0_136 = arith.constant 0 : index
    %c0_137 = arith.constant 0 : index
    %503 = vector.load %arg10[%c1_135, %c0_136, %c0_137] : memref<2x2x32xf32, #tpu.memory_space<vmem>>, vector<1x2x32xf32>
    %504 = vector.shape_cast %503 : vector<1x2x32xf32> to vector<2x32xf32>
    %505 = vector.shape_cast %496 : vector<2x32xf32> to vector<1x2x32xf32>
    tpu.vector_store %arg10[%c1_135, %c0_136, %c0_137], %505 {strides = array<i32>} : memref<2x2x32xf32, #tpu.memory_space<vmem>>, vector<1x2x32xf32>,
    %c0_138 = arith.constant 0 : index
    %c0_139 = arith.constant 0 : index
    %506 = vector.load %arg11[%c0_138, %c0_139] : memref<16x32xf32, #tpu.memory_space<vmem>>, vector<16x32xf32>
    %c0_140 = arith.constant 0 : index
    %c0_141 = arith.constant 0 : index
    %507 = vector.load %arg6[%c0_140, %c0_141] : memref<32x64xf32, #tpu.memory_space<vmem>>, vector<32x64xf32>
    %cst_142 = arith.constant dense<0.000000e+00> : vector<16x64xf32>
    %508 = tpu.matmul %506, %507, %cst_142 {dimension_numbers = #tpu.dot_dimension_numbers<[1], [0], [0], [1], [0, 0, 1, 1], [], []>} : vector<16x32xf32>, vector<32x64xf32>, vector<16x64xf32> -> vector<16x64xf32>
    %c0_143 = arith.constant 0 : index
    %c0_144 = arith.constant 0 : index
    %509 = vector.load %arg7[%c0_143, %c0_144] : memref<1x64xf32, #tpu.memory_space<vmem>>, vector<1x64xf32>
    %510 = vector.broadcast %509 : vector<1x64xf32> to vector<16x64xf32>
    %511 = arith.addf %508, %510 : vector<16x64xf32>
    %c0_145 = arith.constant 0 : index
    %c0_146 = arith.constant 0 : index
    %512 = vector.load %arg8[%c0_145, %c0_146] : memref<16x64xf32, #tpu.memory_space<vmem>>, vector<16x64xf32>
    tpu.vector_store %arg8[%c0_145, %c0_146], %511 {strides = array<i32>} : memref<16x64xf32, #tpu.memory_space<vmem>>, vector<16x64xf32>,
    return
  }
}

</mosaic_0001>

<llo_original>
// kernel: tpu_custom_call.1
$region0: #{tpu_custom_call.1}
  #allocation0 [shape = 'u32[]', space=smem, size = 0x4, offset = 0x4, fixed_abs, tag = 'smem constant byte address 0x4 - core index']
  #allocation1 [shape = 'u32[144,128]{1,0:T(1,128)}', space=vmem, size = 0x12000, scoped, tag = 'internal scratch']
  #allocation2 [shape = 'f32[16,32]{1,0:T(8,128)}', space=vmem, size = 0x2000, scoped, tag = 'scratch operand']
  %s0 = inlined_call_operand.hbm [shape: f32[16,32], index: 0, kind: input, shape index: {}]
  %s1 = inlined_call_operand.hbm [shape: f32[2,2,32], index: 1, kind: input, shape index: {}]
  %s2 = inlined_call_operand.vmem [shape: f32[2,2,32], index: 2, kind: input, shape index: {}]
  %s3 = inlined_call_operand.hbm [shape: f32[2,32,128], index: 3, kind: input, shape index: {}]
  %s4 = inlined_call_operand.hbm [shape: f32[2,32,128], index: 4, kind: input, shape index: {}]
  %s5 = inlined_call_operand.vmem [shape: f32[2,1,128], index: 5, kind: input, shape index: {}]
  %s6 = inlined_call_operand.hbm [shape: f32[32,64], index: 6, kind: input, shape index: {}]
  %s7 = inlined_call_operand.vmem [shape: f32[1,64], index: 7, kind: input, shape index: {}]
  %s8 = inlined_call_operand.hbm [shape: f32[16,64], index: 8, kind: output, shape index: {0}]
  %s9 = inlined_call_operand.hbm [shape: f32[2,2,32], index: 9, kind: output, shape index: {1}]
  %s10 = inlined_call_operand.hbm [shape: f32[2,2,32], index: 10, kind: output, shape index: {2}]
  %11 = xla_tuple %s8, %s9, %s10
  %s12 = sld [smem:[#allocation0]]
  $region78: #{tpu_custom_call.1} parent=0
    _
  %s14 = ssub.s32 1, %s12
  %s15 = scalar_select 0, %s14, %s12
  $region1: #{tpu_custom_call.1} parent=0
    #allocation3 [shape = 'u8[8192]{0}', space=vmem, size = 0x2000, scoped, tag = 'input window, operand 0, single buffered']
    #allocation4 [shape = 's32[1]{0}', space=sflag, size = 0x4, scoped, tag = 'scoped memory for tpu_custom_call.1']
    #allocation5 [shape = 's32[1]{0}', space=sflag, size = 0x4, scoped, tag = 'scoped memory for tpu_custom_call.1']
    #allocation6 [shape = 'u8[2048]{0}', space=vmem, size = 0x800, scoped, tag = 'input window, operand 1, single buffered']
    #allocation7 [shape = 's32[1]{0}', space=sflag, size = 0x4, scoped, tag = 'scoped memory for tpu_custom_call.1']
    #allocation8 [shape = 'u8[32768]{0}', space=vmem, size = 0x8000, scoped, tag = 'input window, operand 3, single buffered']
    #allocation9 [shape = 'u8[32768]{0}', space=vmem, size = 0x8000, scoped, tag = 'input window, operand 4, single buffered']
    #allocation10 [shape = 's32[1]{0}', space=sflag, size = 0x4, scoped, tag = 'scoped memory for tpu_custom_call.1']
    #allocation11 [shape = 'u8[16384]{0}', space=vmem, size = 0x4000, scoped, tag = 'input window, operand 6, single buffered']
    #allocation12 [shape = 'u8[8192]{0}', space=vmem, size = 0x2000, scoped, tag = 'output window, operand 0, single buffered']
    #allocation13 [shape = 'u8[2048]{0}', space=vmem, size = 0x800, scoped, tag = 'output window, operand 1, single buffered']
    #allocation14 [shape = 's32[1]{0}', space=sflag, size = 0x4, scoped, tag = 'scoped memory for tpu_custom_call.1']
    #allocation15 [shape = 'u8[2048]{0}', space=vmem, size = 0x800, scoped, tag = 'output window, operand 2, single buffered']
    %16 = vsyncpa [#allocation4], 0
    %17 = vsyncpa [#allocation7], 0
    %18 = vsyncpa [#allocation10], 0
    %19 = vsyncpa [#allocation5], 0
    %20 = vsyncpa [#allocation14], 0
    // Predicated region
    $region2: #{tpu_custom_call.1} parent=1 // pred_check
      _
    $region3: #{tpu_custom_call.1} parent=1 // pred_check_branch
      %22 = sbr.rel (0) target = $region5
    $region4: #{tpu_custom_call.1} parent=1 // pred_region
      %s24 = ssub.s32 256, 256
      %25 = vsyncadd [#allocation4], %s24
      %s26 = sshll.u32 [#allocation3], 4
      %s27 = int_to_ptr.vmem [resolvable:$true] %s26
      %32 = dma.hbm_to_vmem [thread:$0]  %s0, 256, %s27, [#allocation4], 128, 128, 8
    $region5: #{tpu_custom_call.1} parent=1 // pred_fallthru
      _
    // Predicated region
    $region6: #{tpu_custom_call.1} parent=1 // pred_check
      _
    $region7: #{tpu_custom_call.1} parent=1 // pred_check_branch
      %34 = sbr.rel (0) target = $region9
    $region8: #{tpu_custom_call.1} parent=1 // pred_region
      %s36 = ssub.s32 64, 64
      %37 = vsyncadd [#allocation7], %s36
      %s38 = sshll.u32 [#allocation6], 4
      %s39 = int_to_ptr.vmem [resolvable:$true] %s38
      %44 = dma.hbm_to_vmem [thread:$0]  %s1, 64, %s39, [#allocation7], 32, 32, 2
    $region9: #{tpu_custom_call.1} parent=1 // pred_fallthru
      _
    // Predicated region
    $region10: #{tpu_custom_call.1} parent=1 // pred_check
      _
    $region11: #{tpu_custom_call.1} parent=1 // pred_check_branch
      %46 = sbr.rel (0) target = $region13
    $region12: #{tpu_custom_call.1} parent=1 // pred_region
      _
    $region13: #{tpu_custom_call.1} parent=1 // pred_fallthru
      _
    // Predicated region
    $region14: #{tpu_custom_call.1} parent=1 // pred_check
      _
    $region15: #{tpu_custom_call.1} parent=1 // pred_check_branch
      %48 = sbr.rel (0) target = $region17
    $region16: #{tpu_custom_call.1} parent=1 // pred_region
      %s50 = ssub.s32 1024, 1024
      %51 = vsyncadd [#allocation7], %s50
      %s52 = sshll.u32 [#allocation8], 4
      %s53 = int_to_ptr.vmem [resolvable:$true] %s52
      %58 = dma.hbm_to_vmem [thread:$0]  %s3, 1024, %s53, [#allocation7], 128, 128, 8
    $region17: #{tpu_custom_call.1} parent=1 // pred_fallthru
      _
    // Predicated region
    $region18: #{tpu_custom_call.1} parent=1 // pred_check
      _
    $region19: #{tpu_custom_call.1} parent=1 // pred_check_branch
      %60 = sbr.rel (0) target = $region21
    $region20: #{tpu_custom_call.1} parent=1 // pred_region
      %s62 = ssub.s32 1024, 1024
      %63 = vsyncadd [#allocation10], %s62
      %s64 = sshll.u32 [#allocation9], 4
      %s65 = int_to_ptr.vmem [resolvable:$true] %s64
      %70 = dma.hbm_to_vmem [thread:$0]  %s4, 1024, %s65, [#allocation10], 128, 128, 8
    $region21: #{tpu_custom_call.1} parent=1 // pred_fallthru
      _
    // Predicated region
    $region22: #{tpu_custom_call.1} parent=1 // pred_check
      _
    $region23: #{tpu_custom_call.1} parent=1 // pred_check_branch
      %72 = sbr.rel (0) target = $region25
    $region24: #{tpu_custom_call.1} parent=1 // pred_region
      _
    $region25: #{tpu_custom_call.1} parent=1 // pred_fallthru
      _
    // Predicated region
    $region26: #{tpu_custom_call.1} parent=1 // pred_check
      _
    $region27: #{tpu_custom_call.1} parent=1 // pred_check_branch
      %74 = sbr.rel (0) target = $region29
    $region28: #{tpu_custom_call.1} parent=1 // pred_region
      %s76 = ssub.s32 512, 512
      %77 = vsyncadd [#allocation10], %s76
      %s78 = sshll.u32 [#allocation11], 4
      %s79 = int_to_ptr.vmem [resolvable:$true] %s78
      %84 = dma.hbm_to_vmem [thread:$0]  %s6, 512, %s79, [#allocation10], 128, 128, 8
    $region29: #{tpu_custom_call.1} parent=1 // pred_fallthru
      _
    // Predicated region
    $region30: #{tpu_custom_call.1} parent=1 // pred_check
      _
    $region31: #{tpu_custom_call.1} parent=1 // pred_check_branch
      %86 = sbr.rel (0) target = $region33
    $region32: #{tpu_custom_call.1} parent=1 // pred_region
      _
    $region33: #{tpu_custom_call.1} parent=1 // pred_fallthru
      _
    // Predicated region
    $region34: #{tpu_custom_call.1} parent=1 // pred_check
      _
    $region35: #{tpu_custom_call.1} parent=1 // pred_check_branch
      %88 = sbr.rel (0) target = $region37
    $region36: #{tpu_custom_call.1} parent=1 // pred_region
      %89 = dma.done [#allocation4], 256
    $region37: #{tpu_custom_call.1} parent=1 // pred_fallthru
      _
    // Predicated region
    $region38: #{tpu_custom_call.1} parent=1 // pred_check
      _
    $region39: #{tpu_custom_call.1} parent=1 // pred_check_branch
      %91 = sbr.rel (0) target = $region41
    $region40: #{tpu_custom_call.1} parent=1 // pred_region
      %92 = dma.done [#allocation7], 64
    $region41: #{tpu_custom_call.1} parent=1 // pred_fallthru
      _
    // Predicated region
    $region42: #{tpu_custom_call.1} parent=1 // pred_check
      _
    $region43: #{tpu_custom_call.1} parent=1 // pred_check_branch
      %94 = sbr.rel (0) target = $region45
    $region44: #{tpu_custom_call.1} parent=1 // pred_region
      %95 = dma.done [#allocation7], 1024
    $region45: #{tpu_custom_call.1} parent=1 // pred_fallthru
      _
    // Predicated region
    $region46: #{tpu_custom_call.1} parent=1 // pred_check
      _
    $region47: #{tpu_custom_call.1} parent=1 // pred_check_branch
      %97 = sbr.rel (0) target = $region49
    $region48: #{tpu_custom_call.1} parent=1 // pred_region
      %98 = dma.done [#allocation10], 1024
    $region49: #{tpu_custom_call.1} parent=1 // pred_fallthru
      _
    // Predicated region
    $region50: #{tpu_custom_call.1} parent=1 // pred_check
      _
    $region51: #{tpu_custom_call.1} parent=1 // pred_check_branch
      %100 = sbr.rel (0) target = $region53
    $region52: #{tpu_custom_call.1} parent=1 // pred_region
      %101 = dma.done [#allocation10], 512
    $region53: #{tpu_custom_call.1} parent=1 // pred_fallthru
      _
    %v102 = vld [vmem:[#allocation3] sm:$0xff]
    %v103 = vld [vmem:[#allocation3 + $0x8] sm:$0xff]
    %vm104 = vcmask 261120
    %105 = vst.msk [vmem:[#allocation2] sm:$0xff] %vm104, %v102
    %106 = vst.msk [vmem:[#allocation2 + $0x8] sm:$0xff] %vm104, %v103
    %v107 = vld [vmem:[#allocation8] sm:$0xff]
    %v108 = vld [vmem:[#allocation8 + $0x8] sm:$0xff]
    %v109 = vld [vmem:[#allocation8 + $0x10] sm:$0xff]
    %v110 = vld [vmem:[#allocation8 + $0x18] sm:$0xff]
    %v111 = vld [vmem:[#allocation9] sm:$0xff]
    %v112 = vld [vmem:[#allocation9 + $0x8] sm:$0xff]
    %v113 = vld [vmem:[#allocation9 + $0x10] sm:$0xff]
    %v114 = vld [vmem:[#allocation9 + $0x18] sm:$0xff]
    %v115 = vld [vmem:[%s5] sm:$0x1]
    %v116 = vld [vmem:[#allocation2] sm:$0xff]
    %v117 = vld [vmem:[#allocation2 + $0x8] sm:$0xff]
    %v119 = vlaneseq
    %v120 = vshrl.u32 %v119, 7
    %v121 = vsub.s32 0, %v120
    %v122 = vrot.slane %v115, %v121
    %v125 = vsel %vm104, %v116, 0
    %v128 = vsel %vm104, %v117, 0
    %130 = vmatprep.subr.mxu0 0.0
    %131 = vmatpush1.msra.mxu0 %v107
    %132 = vmatprep.subr.mxu0 0.0
    %133 = vmatpush1.msra.mxu0 %v108
    %134 = vmatprep.subr.mxu0 0.0
    %135 = vmatpush1.msra.mxu0 %v109
    %136 = vmatprep.subr.mxu0 0.0
    %137 = vmatpush1.msra.mxu0 %v110
    %138 = vmatprep.subr.mxu0 0.0
    %139 = vmatpush1.msra.mxu0 0.0
    %140 = vmatprep.subr.mxu0 0.0
    %141 = vmatpush1.msra.mxu0 0.0
    %142 = vmatprep.subr.mxu0 0.0
    %143 = vmatpush1.msra.mxu0 0.0
    %144 = vmatprep.subr.mxu0 0.0
    %145 = vmatpush1.msra.mxu0 0.0
    %146 = vmatprep.subr.mxu0 0.0
    %147 = vmatpush1.msra.mxu0 0.0
    %148 = vmatprep.subr.mxu0 0.0
    %149 = vmatpush1.msra.mxu0 0.0
    %150 = vmatprep.subr.mxu0 0.0
    %151 = vmatpush1.msra.mxu0 0.0
    %152 = vmatprep.subr.mxu0 0.0
    %153 = vmatpush1.msra.mxu0 0.0
    %154 = vmatprep.subr.mxu0 0.0
    %155 = vmatpush1.msra.mxu0 0.0
    %156 = vmatprep.subr.mxu0 0.0
    %157 = vmatpush1.msra.mxu0 0.0
    %158 = vmatprep.subr.mxu0 0.0
    %159 = vmatpush1.msra.mxu0 0.0
    %160 = vmatprep.subr.mxu0 0.0
    %161 = vmatpush1.msra.mxu0 0.0
    %162 = vmatprep.subr.mxu0 0.0
    %163 = vmatpush1.msra.mxu0 0.0
    %164 = vmatprep.subr.mxu0 0.0
    %165 = vmatpush1.msra.mxu0 0.0
    %166 = vmatprep.subr.mxu0 0.0
    %167 = vmatpush1.msra.mxu0 0.0
    %168 = vmatprep.subr.mxu0 0.0
    %169 = vmatpush1.msra.mxu0 0.0
    %170 = vmatprep.subr.mxu0 0.0
    %171 = vmatpush1.msra.mxu0 0.0
    %172 = vmatprep.subr.mxu0 0.0
    %173 = vmatpush1.msra.mxu0 0.0
    %174 = vmatprep.subr.mxu0 0.0
    %175 = vmatpush1.msra.mxu0 0.0
    %176 = vmatprep.subr.mxu0 0.0
    %177 = vmatpush1.msra.mxu0 0.0
    %178 = vmatprep.subr.mxu0 0.0
    %179 = vmatpush1.msra.mxu0 0.0
    %180 = vmatprep.subr.mxu0 0.0
    %181 = vmatpush1.msra.mxu0 0.0
    %182 = vmatprep.subr.mxu0 0.0
    %183 = vmatpush1.msra.mxu0 0.0
    %184 = vmatprep.subr.mxu0 0.0
    %185 = vmatpush1.msra.mxu0 0.0
    %186 = vmatprep.subr.mxu0 0.0
    %187 = vmatpush1.msra.mxu0 0.0
    %188 = vmatprep.subr.mxu0 0.0
    %189 = vmatpush1.msra.mxu0 0.0
    %190 = vmatprep.subr.mxu0 0.0
    %191 = vmatpush1.msra.mxu0 0.0
    %192 = vmatprep.subr.mxu0 0.0
    %193 = vmatpush1.msra.mxu0 0.0
    %194 = vmatprep.mubr.f32.mxu0 0.0
    %195 = vmatmul.mubr.f32.gmra.mrb[0].mxu0 %v125
    %v196 = vpop.f32.mrb[0].mxu0
    %v197 = vadd.f32 %v122, %v196
    %v198 = vpop.f32.mrb[0].mxu0
    %199 = vmatprep.mubr.f32.mxu0 0.0
    %200 = vmatmul.mubr.f32.gmra.mrb[0].mxu0 %v128
    %v201 = vpop.f32.mrb[0].mxu0
    %v202 = vadd.f32 %v122, %v201
    %v203 = vpop.f32.mrb[0].mxu0
    %204 = vdwg.mxu0
    %v205 = vld [vmem:[#allocation6] sm:$0x3]
    %v206 = vld [vmem:[%s2] sm:$0x3]
    %v208 = vsel %vm104, %v205, 0
    %210 = vmatprep.subr.mxu0 0.0
    %211 = vmatpush1.msra.mxu0 %v111
    %212 = vmatprep.subr.mxu0 0.0
    %213 = vmatpush1.msra.mxu0 %v112
    %214 = vmatprep.subr.mxu0 0.0
    %215 = vmatpush1.msra.mxu0 %v113
    %216 = vmatprep.subr.mxu0 0.0
    %217 = vmatpush1.msra.mxu0 %v114
    %218 = vmatprep.subr.mxu0 0.0
    %219 = vmatpush1.msra.mxu0 0.0
    %220 = vmatprep.subr.mxu0 0.0
    %221 = vmatpush1.msra.mxu0 0.0
    %222 = vmatprep.subr.mxu0 0.0
    %223 = vmatpush1.msra.mxu0 0.0
    %224 = vmatprep.subr.mxu0 0.0
    %225 = vmatpush1.msra.mxu0 0.0
    %226 = vmatprep.subr.mxu0 0.0
    %227 = vmatpush1.msra.mxu0 0.0
    %228 = vmatprep.subr.mxu0 0.0
    %229 = vmatpush1.msra.mxu0 0.0
    %230 = vmatprep.subr.mxu0 0.0
    %231 = vmatpush1.msra.mxu0 0.0
    %232 = vmatprep.subr.mxu0 0.0
    %233 = vmatpush1.msra.mxu0 0.0
    %234 = vmatprep.subr.mxu0 0.0
    %235 = vmatpush1.msra.mxu0 0.0
    %236 = vmatprep.subr.mxu0 0.0
    %237 = vmatpush1.msra.mxu0 0.0
    %238 = vmatprep.subr.mxu0 0.0
    %239 = vmatpush1.msra.mxu0 0.0
    %240 = vmatprep.subr.mxu0 0.0
    %241 = vmatpush1.msra.mxu0 0.0
    %242 = vmatprep.subr.mxu0 0.0
    %243 = vmatpush1.msra.mxu0 0.0
    %244 = vmatprep.subr.mxu0 0.0
    %245 = vmatpush1.msra.mxu0 0.0
    %246 = vmatprep.subr.mxu0 0.0
    %247 = vmatpush1.msra.mxu0 0.0
    %248 = vmatprep.subr.mxu0 0.0
    %249 = vmatpush1.msra.mxu0 0.0
    %250 = vmatprep.subr.mxu0 0.0
    %251 = vmatpush1.msra.mxu0 0.0
    %252 = vmatprep.subr.mxu0 0.0
    %253 = vmatpush1.msra.mxu0 0.0
    %254 = vmatprep.subr.mxu0 0.0
    %255 = vmatpush1.msra.mxu0 0.0
    %256 = vmatprep.subr.mxu0 0.0
    %257 = vmatpush1.msra.mxu0 0.0
    %258 = vmatprep.subr.mxu0 0.0
    %259 = vmatpush1.msra.mxu0 0.0
    %260 = vmatprep.subr.mxu0 0.0
    %261 = vmatpush1.msra.mxu0 0.0
    %262 = vmatprep.subr.mxu0 0.0
    %263 = vmatpush1.msra.mxu0 0.0
    %264 = vmatprep.subr.mxu0 0.0
    %265 = vmatpush1.msra.mxu0 0.0
    %266 = vmatprep.subr.mxu0 0.0
    %267 = vmatpush1.msra.mxu0 0.0
    %268 = vmatprep.subr.mxu0 0.0
    %269 = vmatpush1.msra.mxu0 0.0
    %270 = vmatprep.subr.mxu0 0.0
    %271 = vmatpush1.msra.mxu0 0.0
    %272 = vmatprep.subr.mxu0 0.0
    %273 = vmatpush1.msra.mxu0 0.0
    %274 = vmatprep.mubr.f32.mxu0 0.0
    %275 = vmatmul.mubr.f32.gmra.mrb[0].mxu0 %v208
    %v276 = vpop.f32.mrb[0].mxu0
    %v277 = vadd.f32 0.0, %v276
    %v278 = vpop.f32.mrb[0].mxu0
    %279 = vdwg.mxu0
    %v280 = vadd.f32 %v197, %v277
    %v281 = vxor.u32 %v280, 2147483648
    %v282 = vmul.f32 %v281, 1.442695
    %v283 = vpow.pop %v282
    %v284 = vadd.f32 %v283, 1.0
    %v285 = vrcp.pop %v284
    %v286 = vmul.f32 1.0, %v285
    %v287 = vtanh.pop %v280
    %289 = vrot.lane.b32.xlu0 %v206, 32
    %v290 = vpop.permute.xlu0 %289
    %v292 = vmul.f32 %v286, %v290
    %294 = vrot.lane.b32.xlu0 %v287, 64
    %v295 = vpop.permute.xlu0 %294
    %v297 = vmul.f32 %v286, %v295
    %299 = vrot.lane.b32.xlu0 %v297, 32
    %v300 = vpop.permute.xlu0 %299
    %v302 = vadd.f32 %v292, %v300
    %v303 = vtanh.pop %v302
    %305 = vrot.lane.b32.xlu0 %v303, 64
    %v306 = vpop.permute.xlu0 %305
    %v308 = vmul.f32 %v286, %v306
    %310 = vrot.lane.b32.xlu0 %v308, 32
    %v311 = vpop.permute.xlu0 %310
    %vm313 = vcmask 254976
    %314 = vst.msk [vmem:[#allocation2] sm:$0x3] %vm313, %v311
    %v315 = vsel %vm104, %v311, 0
    %317 = vmatprep.subr.mxu0 0.0
    %318 = vmatpush1.msra.mxu0 %v111
    %319 = vmatprep.subr.mxu0 0.0
    %320 = vmatpush1.msra.mxu0 %v112
    %321 = vmatprep.subr.mxu0 0.0
    %322 = vmatpush1.msra.mxu0 %v113
    %323 = vmatprep.subr.mxu0 0.0
    %324 = vmatpush1.msra.mxu0 %v114
    %325 = vmatprep.subr.mxu0 0.0
    %326 = vmatpush1.msra.mxu0 0.0
    %327 = vmatprep.subr.mxu0 0.0
    %328 = vmatpush1.msra.mxu0 0.0
    %329 = vmatprep.subr.mxu0 0.0
    %330 = vmatpush1.msra.mxu0 0.0
    %331 = vmatprep.subr.mxu0 0.0
    %332 = vmatpush1.msra.mxu0 0.0
    %333 = vmatprep.subr.mxu0 0.0
    %334 = vmatpush1.msra.mxu0 0.0
    %335 = vmatprep.subr.mxu0 0.0
    %336 = vmatpush1.msra.mxu0 0.0
    %337 = vmatprep.subr.mxu0 0.0
    %338 = vmatpush1.msra.mxu0 0.0
    %339 = vmatprep.subr.mxu0 0.0
    %340 = vmatpush1.msra.mxu0 0.0
    %341 = vmatprep.subr.mxu0 0.0
    %342 = vmatpush1.msra.mxu0 0.0
    %343 = vmatprep.subr.mxu0 0.0
    %344 = vmatpush1.msra.mxu0 0.0
    %345 = vmatprep.subr.mxu0 0.0
    %346 = vmatpush1.msra.mxu0 0.0
    %347 = vmatprep.subr.mxu0 0.0
    %348 = vmatpush1.msra.mxu0 0.0
    %349 = vmatprep.subr.mxu0 0.0
    %350 = vmatpush1.msra.mxu0 0.0
    %351 = vmatprep.subr.mxu0 0.0
    %352 = vmatpush1.msra.mxu0 0.0
    %353 = vmatprep.subr.mxu0 0.0
    %354 = vmatpush1.msra.mxu0 0.0
    %355 = vmatprep.subr.mxu0 0.0
    %356 = vmatpush1.msra.mxu0 0.0
    %357 = vmatprep.subr.mxu0 0.0
    %358 = vmatpush1.msra.mxu0 0.0
    %359 = vmatprep.subr.mxu0 0.0
    %360 = vmatpush1.msra.mxu0 0.0
    %361 = vmatprep.subr.mxu0 0.0
    %362 = vmatpush1.msra.mxu0 0.0
    %363 = vmatprep.subr.mxu0 0.0
    %364 = vmatpush1.msra.mxu0 0.0
    %365 = vmatprep.subr.mxu0 0.0
    %366 = vmatpush1.msra.mxu0 0.0
    %367 = vmatprep.subr.mxu0 0.0
    %368 = vmatpush1.msra.mxu0 0.0
    %369 = vmatprep.subr.mxu0 0.0
    %370 = vmatpush1.msra.mxu0 0.0
    %371 = vmatprep.subr.mxu0 0.0
    %372 = vmatpush1.msra.mxu0 0.0
    %373 = vmatprep.subr.mxu0 0.0
    %374 = vmatpush1.msra.mxu0 0.0
    %375 = vmatprep.subr.mxu0 0.0
    %376 = vmatpush1.msra.mxu0 0.0
    %377 = vmatprep.subr.mxu0 0.0
    %378 = vmatpush1.msra.mxu0 0.0
    %379 = vmatprep.subr.mxu0 0.0
    %380 = vmatpush1.msra.mxu0 0.0
    %381 = vmatprep.mubr.f32.mxu0 0.0
    %382 = vmatmul.mubr.f32.gmra.mrb[0].mxu0 %v315
    %v383 = vpop.f32.mrb[0].mxu0
    %v384 = vadd.f32 0.0, %v383
    %v385 = vpop.f32.mrb[0].mxu0
    %386 = vdwg.mxu0
    %v388 = vrot.slane %v384, 6
    %v390 = vadd.f32 %v197, %v388
    %v391 = vxor.u32 %v390, 2147483648
    %v392 = vmul.f32 %v391, 1.442695
    %v393 = vpow.pop %v392
    %v394 = vadd.f32 %v393, 1.0
    %v395 = vrcp.pop %v394
    %v396 = vmul.f32 1.0, %v395
    %v397 = vtanh.pop %v390
    %v399 = vrot.slane %v302, 6
    %v401 = vmul.f32 %v396, %v399
    %403 = vrot.lane.b32.xlu0 %v397, 64
    %v404 = vpop.permute.xlu0 %403
    %v406 = vmul.f32 %v396, %v404
    %408 = vrot.lane.b32.xlu0 %v406, 32
    %v409 = vpop.permute.xlu0 %408
    %v411 = vadd.f32 %v401, %v409
    %v412 = vtanh.pop %v411
    %414 = vrot.lane.b32.xlu0 %v412, 64
    %v415 = vpop.permute.xlu0 %414
    %v417 = vmul.f32 %v396, %v415
    %419 = vrot.lane.b32.xlu0 %v417, 32
    %v420 = vpop.permute.xlu0 %419
    %vm422 = vcmask 257026
    %423 = vst.msk [vmem:[#allocation2] sm:$0xc] %vm422, %v420
    %v424 = vrot.slane %v417, 2
    %425 = vrot.lane.b32.xlu0 %v424, 32
    %v426 = vpop.permute.xlu0 %425
    %v427 = vsel %vm104, %v426, 0
    %429 = vmatprep.subr.mxu0 0.0
    %430 = vmatpush1.msra.mxu0 %v111
    %431 = vmatprep.subr.mxu0 0.0
    %432 = vmatpush1.msra.mxu0 %v112
    %433 = vmatprep.subr.mxu0 0.0
    %434 = vmatpush1.msra.mxu0 %v113
    %435 = vmatprep.subr.mxu0 0.0
    %436 = vmatpush1.msra.mxu0 %v114
    %437 = vmatprep.subr.mxu0 0.0
    %438 = vmatpush1.msra.mxu0 0.0
    %439 = vmatprep.subr.mxu0 0.0
    %440 = vmatpush1.msra.mxu0 0.0
    %441 = vmatprep.subr.mxu0 0.0
    %442 = vmatpush1.msra.mxu0 0.0
    %443 = vmatprep.subr.mxu0 0.0
    %444 = vmatpush1.msra.mxu0 0.0
    %445 = vmatprep.subr.mxu0 0.0
    %446 = vmatpush1.msra.mxu0 0.0
    %447 = vmatprep.subr.mxu0 0.0
    %448 = vmatpush1.msra.mxu0 0.0
    %449 = vmatprep.subr.mxu0 0.0
    %450 = vmatpush1.msra.mxu0 0.0
    %451 = vmatprep.subr.mxu0 0.0
    %452 = vmatpush1.msra.mxu0 0.0
    %453 = vmatprep.subr.mxu0 0.0
    %454 = vmatpush1.msra.mxu0 0.0
    %455 = vmatprep.subr.mxu0 0.0
    %456 = vmatpush1.msra.mxu0 0.0
    %457 = vmatprep.subr.mxu0 0.0
    %458 = vmatpush1.msra.mxu0 0.0
    %459 = vmatprep.subr.mxu0 0.0
    %460 = vmatpush1.msra.mxu0 0.0
    %461 = vmatprep.subr.mxu0 0.0
    %462 = vmatpush1.msra.mxu0 0.0
    %463 = vmatprep.subr.mxu0 0.0
    %464 = vmatpush1.msra.mxu0 0.0
    %465 = vmatprep.subr.mxu0 0.0
    %466 = vmatpush1.msra.mxu0 0.0
    %467 = vmatprep.subr.mxu0 0.0
    %468 = vmatpush1.msra.mxu0 0.0
    %469 = vmatprep.subr.mxu0 0.0
    %470 = vmatpush1.msra.mxu0 0.0
    %471 = vmatprep.subr.mxu0 0.0
    %472 = vmatpush1.msra.mxu0 0.0
    %473 = vmatprep.subr.mxu0 0.0
    %474 = vmatpush1.msra.mxu0 0.0
    %475 = vmatprep.subr.mxu0 0.0
    %476 = vmatpush1.msra.mxu0 0.0
    %477 = vmatprep.subr.mxu0 0.0
    %478 = vmatpush1.msra.mxu0 0.0
    %479 = vmatprep.subr.mxu0 0.0
    %480 = vmatpush1.msra.mxu0 0.0
    %481 = vmatprep.subr.mxu0 0.0
    %482 = vmatpush1.msra.mxu0 0.0
    %483 = vmatprep.subr.mxu0 0.0
    %484 = vmatpush1.msra.mxu0 0.0
    %485 = vmatprep.subr.mxu0 0.0
    %486 = vmatpush1.msra.mxu0 0.0
    %487 = vmatprep.subr.mxu0 0.0
    %488 = vmatpush1.msra.mxu0 0.0
    %489 = vmatprep.subr.mxu0 0.0
    %490 = vmatpush1.msra.mxu0 0.0
    %491 = vmatprep.subr.mxu0 0.0
    %492 = vmatpush1.msra.mxu0 0.0
    %493 = vmatprep.mubr.f32.mxu0 0.0
    %494 = vmatmul.mubr.f32.gmra.mrb[0].mxu0 %v427
    %v495 = vpop.f32.mrb[0].mxu0
    %v496 = vadd.f32 0.0, %v495
    %v497 = vpop.f32.mrb[0].mxu0
    %498 = vdwg.mxu0
    %v500 = vrot.slane %v496, 4
    %v502 = vadd.f32 %v197, %v500
    %v503 = vxor.u32 %v502, 2147483648
    %v504 = vmul.f32 %v503, 1.442695
    %v505 = vpow.pop %v504
    %v506 = vadd.f32 %v505, 1.0
    %v507 = vrcp.pop %v506
    %v508 = vmul.f32 1.0, %v507
    %v509 = vtanh.pop %v502
    %v511 = vrot.slane %v411, 6
    %v513 = vmul.f32 %v508, %v511
    %515 = vrot.lane.b32.xlu0 %v509, 64
    %v516 = vpop.permute.xlu0 %515
    %v518 = vmul.f32 %v508, %v516
    %520 = vrot.lane.b32.xlu0 %v518, 32
    %v521 = vpop.permute.xlu0 %520
    %v523 = vadd.f32 %v513, %v521
    %v524 = vtanh.pop %v523
    %526 = vrot.lane.b32.xlu0 %v524, 64
    %v527 = vpop.permute.xlu0 %526
    %v529 = vmul.f32 %v508, %v527
    %531 = vrot.lane.b32.xlu0 %v529, 32
    %v532 = vpop.permute.xlu0 %531
    %vm534 = vcmask 259076
    %535 = vst.msk [vmem:[#allocation2] sm:$0x30] %vm534, %v532
    %v536 = vrot.slane %v529, 4
    %537 = vrot.lane.b32.xlu0 %v536, 32
    %v538 = vpop.permute.xlu0 %537
    %v539 = vsel %vm104, %v538, 0
    %541 = vmatprep.subr.mxu0 0.0
    %542 = vmatpush1.msra.mxu0 %v111
    %543 = vmatprep.subr.mxu0 0.0
    %544 = vmatpush1.msra.mxu0 %v112
    %545 = vmatprep.subr.mxu0 0.0
    %546 = vmatpush1.msra.mxu0 %v113
    %547 = vmatprep.subr.mxu0 0.0
    %548 = vmatpush1.msra.mxu0 %v114
    %549 = vmatprep.subr.mxu0 0.0
    %550 = vmatpush1.msra.mxu0 0.0
    %551 = vmatprep.subr.mxu0 0.0
    %552 = vmatpush1.msra.mxu0 0.0
    %553 = vmatprep.subr.mxu0 0.0
    %554 = vmatpush1.msra.mxu0 0.0
    %555 = vmatprep.subr.mxu0 0.0
    %556 = vmatpush1.msra.mxu0 0.0
    %557 = vmatprep.subr.mxu0 0.0
    %558 = vmatpush1.msra.mxu0 0.0
    %559 = vmatprep.subr.mxu0 0.0
    %560 = vmatpush1.msra.mxu0 0.0
    %561 = vmatprep.subr.mxu0 0.0
    %562 = vmatpush1.msra.mxu0 0.0
    %563 = vmatprep.subr.mxu0 0.0
    %564 = vmatpush1.msra.mxu0 0.0
    %565 = vmatprep.subr.mxu0 0.0
    %566 = vmatpush1.msra.mxu0 0.0
    %567 = vmatprep.subr.mxu0 0.0
    %568 = vmatpush1.msra.mxu0 0.0
    %569 = vmatprep.subr.mxu0 0.0
    %570 = vmatpush1.msra.mxu0 0.0
    %571 = vmatprep.subr.mxu0 0.0
    %572 = vmatpush1.msra.mxu0 0.0
    %573 = vmatprep.subr.mxu0 0.0
    %574 = vmatpush1.msra.mxu0 0.0
    %575 = vmatprep.subr.mxu0 0.0
    %576 = vmatpush1.msra.mxu0 0.0
    %577 = vmatprep.subr.mxu0 0.0
    %578 = vmatpush1.msra.mxu0 0.0
    %579 = vmatprep.subr.mxu0 0.0
    %580 = vmatpush1.msra.mxu0 0.0
    %581 = vmatprep.subr.mxu0 0.0
    %582 = vmatpush1.msra.mxu0 0.0
    %583 = vmatprep.subr.mxu0 0.0
    %584 = vmatpush1.msra.mxu0 0.0
    %585 = vmatprep.subr.mxu0 0.0
    %586 = vmatpush1.msra.mxu0 0.0
    %587 = vmatprep.subr.mxu0 0.0
    %588 = vmatpush1.msra.mxu0 0.0
    %589 = vmatprep.subr.mxu0 0.0
    %590 = vmatpush1.msra.mxu0 0.0
    %591 = vmatprep.subr.mxu0 0.0
    %592 = vmatpush1.msra.mxu0 0.0
    %593 = vmatprep.subr.mxu0 0.0
    %594 = vmatpush1.msra.mxu0 0.0
    %595 = vmatprep.subr.mxu0 0.0
    %596 = vmatpush1.msra.mxu0 0.0
    %597 = vmatprep.subr.mxu0 0.0
    %598 = vmatpush1.msra.mxu0 0.0
    %599 = vmatprep.subr.mxu0 0.0
    %600 = vmatpush1.msra.mxu0 0.0
    %601 = vmatprep.subr.mxu0 0.0
    %602 = vmatpush1.msra.mxu0 0.0
    %603 = vmatprep.subr.mxu0 0.0
    %604 = vmatpush1.msra.mxu0 0.0
    %605 = vmatprep.mubr.f32.mxu0 0.0
    %606 = vmatmul.mubr.f32.gmra.mrb[0].mxu0 %v539
    %v607 = vpop.f32.mrb[0].mxu0
    %v608 = vadd.f32 0.0, %v607
    %v609 = vpop.f32.mrb[0].mxu0
    %610 = vdwg.mxu0
    %v612 = vrot.slane %v608, 2
    %v614 = vadd.f32 %v197, %v612
    %v615 = vxor.u32 %v614, 2147483648
    %v616 = vmul.f32 %v615, 1.442695
    %v617 = vpow.pop %v616
    %v618 = vadd.f32 %v617, 1.0
    %v619 = vrcp.pop %v618
    %v620 = vmul.f32 1.0, %v619
    %v621 = vtanh.pop %v614
    %v623 = vrot.slane %v523, 6
    %v625 = vmul.f32 %v620, %v623
    %627 = vrot.lane.b32.xlu0 %v621, 64
    %v628 = vpop.permute.xlu0 %627
    %v630 = vmul.f32 %v620, %v628
    %632 = vrot.lane.b32.xlu0 %v630, 32
    %v633 = vpop.permute.xlu0 %632
    %v635 = vadd.f32 %v625, %v633
    %v636 = vtanh.pop %v635
    %638 = vrot.lane.b32.xlu0 %v636, 64
    %v639 = vpop.permute.xlu0 %638
    %v641 = vmul.f32 %v620, %v639
    %643 = vrot.lane.b32.xlu0 %v641, 32
    %v644 = vpop.permute.xlu0 %643
    %vm646 = vcmask 261126
    %647 = vst.msk [vmem:[#allocation2] sm:$0xc0] %vm646, %v644
    %v648 = vrot.slane %v641, 6
    %649 = vrot.lane.b32.xlu0 %v648, 32
    %v650 = vpop.permute.xlu0 %649
    %v651 = vsel %vm104, %v650, 0
    %653 = vmatprep.subr.mxu0 0.0
    %654 = vmatpush1.msra.mxu0 %v111
    %655 = vmatprep.subr.mxu0 0.0
    %656 = vmatpush1.msra.mxu0 %v112
    %657 = vmatprep.subr.mxu0 0.0
    %658 = vmatpush1.msra.mxu0 %v113
    %659 = vmatprep.subr.mxu0 0.0
    %660 = vmatpush1.msra.mxu0 %v114
    %661 = vmatprep.subr.mxu0 0.0
    %662 = vmatpush1.msra.mxu0 0.0
    %663 = vmatprep.subr.mxu0 0.0
    %664 = vmatpush1.msra.mxu0 0.0
    %665 = vmatprep.subr.mxu0 0.0
    %666 = vmatpush1.msra.mxu0 0.0
    %667 = vmatprep.subr.mxu0 0.0
    %668 = vmatpush1.msra.mxu0 0.0
    %669 = vmatprep.subr.mxu0 0.0
    %670 = vmatpush1.msra.mxu0 0.0
    %671 = vmatprep.subr.mxu0 0.0
    %672 = vmatpush1.msra.mxu0 0.0
    %673 = vmatprep.subr.mxu0 0.0
    %674 = vmatpush1.msra.mxu0 0.0
    %675 = vmatprep.subr.mxu0 0.0
    %676 = vmatpush1.msra.mxu0 0.0
    %677 = vmatprep.subr.mxu0 0.0
    %678 = vmatpush1.msra.mxu0 0.0
    %679 = vmatprep.subr.mxu0 0.0
    %680 = vmatpush1.msra.mxu0 0.0
    %681 = vmatprep.subr.mxu0 0.0
    %682 = vmatpush1.msra.mxu0 0.0
    %683 = vmatprep.subr.mxu0 0.0
    %684 = vmatpush1.msra.mxu0 0.0
    %685 = vmatprep.subr.mxu0 0.0
    %686 = vmatpush1.msra.mxu0 0.0
    %687 = vmatprep.subr.mxu0 0.0
    %688 = vmatpush1.msra.mxu0 0.0
    %689 = vmatprep.subr.mxu0 0.0
    %690 = vmatpush1.msra.mxu0 0.0
    %691 = vmatprep.subr.mxu0 0.0
    %692 = vmatpush1.msra.mxu0 0.0
    %693 = vmatprep.subr.mxu0 0.0
    %694 = vmatpush1.msra.mxu0 0.0
    %695 = vmatprep.subr.mxu0 0.0
    %696 = vmatpush1.msra.mxu0 0.0
    %697 = vmatprep.subr.mxu0 0.0
    %698 = vmatpush1.msra.mxu0 0.0
    %699 = vmatprep.subr.mxu0 0.0
    %700 = vmatpush1.msra.mxu0 0.0
    %701 = vmatprep.subr.mxu0 0.0
    %702 = vmatpush1.msra.mxu0 0.0
    %703 = vmatprep.subr.mxu0 0.0
    %704 = vmatpush1.msra.mxu0 0.0
    %705 = vmatprep.subr.mxu0 0.0
    %706 = vmatpush1.msra.mxu0 0.0
    %707 = vmatprep.subr.mxu0 0.0
    %708 = vmatpush1.msra.mxu0 0.0
    %709 = vmatprep.subr.mxu0 0.0
    %710 = vmatpush1.msra.mxu0 0.0
    %711 = vmatprep.subr.mxu0 0.0
    %712 = vmatpush1.msra.mxu0 0.0
    %713 = vmatprep.subr.mxu0 0.0
    %714 = vmatpush1.msra.mxu0 0.0
    %715 = vmatprep.subr.mxu0 0.0
    %716 = vmatpush1.msra.mxu0 0.0
    %717 = vmatprep.mubr.f32.mxu0 0.0
    %718 = vmatmul.mubr.f32.gmra.mrb[0].mxu0 %v651
    %v719 = vpop.f32.mrb[0].mxu0
    %v720 = vadd.f32 0.0, %v719
    %v721 = vpop.f32.mrb[0].mxu0
    %722 = vdwg.mxu0
    %v723 = vadd.f32 %v202, %v720
    %v724 = vxor.u32 %v723, 2147483648
    %v725 = vmul.f32 %v724, 1.442695
    %v726 = vpow.pop %v725
    %v727 = vadd.f32 %v726, 1.0
    %v728 = vrcp.pop %v727
    %v729 = vmul.f32 1.0, %v728
    %v730 = vtanh.pop %v723
    %v732 = vrot.slane %v635, 6
    %v734 = vmul.f32 %v729, %v732
    %736 = vrot.lane.b32.xlu0 %v730, 64
    %v737 = vpop.permute.xlu0 %736
    %v739 = vmul.f32 %v729, %v737
    %741 = vrot.lane.b32.xlu0 %v739, 32
    %v742 = vpop.permute.xlu0 %741
    %v744 = vadd.f32 %v734, %v742
    %v745 = vtanh.pop %v744
    %747 = vrot.lane.b32.xlu0 %v745, 64
    %v748 = vpop.permute.xlu0 %747
    %v750 = vmul.f32 %v729, %v748
    %752 = vrot.lane.b32.xlu0 %v750, 32
    %v753 = vpop.permute.xlu0 %752
    %755 = vst.msk [vmem:[#allocation2 + $0x8] sm:$0x3] %vm313, %v753
    %v756 = vsel %vm104, %v753, 0
    %758 = vmatprep.subr.mxu0 0.0
    %759 = vmatpush1.msra.mxu0 %v111
    %760 = vmatprep.subr.mxu0 0.0
    %761 = vmatpush1.msra.mxu0 %v112
    %762 = vmatprep.subr.mxu0 0.0
    %763 = vmatpush1.msra.mxu0 %v113
    %764 = vmatprep.subr.mxu0 0.0
    %765 = vmatpush1.msra.mxu0 %v114
    %766 = vmatprep.subr.mxu0 0.0
    %767 = vmatpush1.msra.mxu0 0.0
    %768 = vmatprep.subr.mxu0 0.0
    %769 = vmatpush1.msra.mxu0 0.0
    %770 = vmatprep.subr.mxu0 0.0
    %771 = vmatpush1.msra.mxu0 0.0
    %772 = vmatprep.subr.mxu0 0.0
    %773 = vmatpush1.msra.mxu0 0.0
    %774 = vmatprep.subr.mxu0 0.0
    %775 = vmatpush1.msra.mxu0 0.0
    %776 = vmatprep.subr.mxu0 0.0
    %777 = vmatpush1.msra.mxu0 0.0
    %778 = vmatprep.subr.mxu0 0.0
    %779 = vmatpush1.msra.mxu0 0.0
    %780 = vmatprep.subr.mxu0 0.0
    %781 = vmatpush1.msra.mxu0 0.0
    %782 = vmatprep.subr.mxu0 0.0
    %783 = vmatpush1.msra.mxu0 0.0
    %784 = vmatprep.subr.mxu0 0.0
    %785 = vmatpush1.msra.mxu0 0.0
    %786 = vmatprep.subr.mxu0 0.0
    %787 = vmatpush1.msra.mxu0 0.0
    %788 = vmatprep.subr.mxu0 0.0
    %789 = vmatpush1.msra.mxu0 0.0
    %790 = vmatprep.subr.mxu0 0.0
    %791 = vmatpush1.msra.mxu0 0.0
    %792 = vmatprep.subr.mxu0 0.0
    %793 = vmatpush1.msra.mxu0 0.0
    %794 = vmatprep.subr.mxu0 0.0
    %795 = vmatpush1.msra.mxu0 0.0
    %796 = vmatprep.subr.mxu0 0.0
    %797 = vmatpush1.msra.mxu0 0.0
    %798 = vmatprep.subr.mxu0 0.0
    %799 = vmatpush1.msra.mxu0 0.0
    %800 = vmatprep.subr.mxu0 0.0
    %801 = vmatpush1.msra.mxu0 0.0
    %802 = vmatprep.subr.mxu0 0.0
    %803 = vmatpush1.msra.mxu0 0.0
    %804 = vmatprep.subr.mxu0 0.0
    %805 = vmatpush1.msra.mxu0 0.0
    %806 = vmatprep.subr.mxu0 0.0
    %807 = vmatpush1.msra.mxu0 0.0
    %808 = vmatprep.subr.mxu0 0.0
    %809 = vmatpush1.msra.mxu0 0.0
    %810 = vmatprep.subr.mxu0 0.0
    %811 = vmatpush1.msra.mxu0 0.0
    %812 = vmatprep.subr.mxu0 0.0
    %813 = vmatpush1.msra.mxu0 0.0
    %814 = vmatprep.subr.mxu0 0.0
    %815 = vmatpush1.msra.mxu0 0.0
    %816 = vmatprep.subr.mxu0 0.0
    %817 = vmatpush1.msra.mxu0 0.0
    %818 = vmatprep.subr.mxu0 0.0
    %819 = vmatpush1.msra.mxu0 0.0
    %820 = vmatprep.subr.mxu0 0.0
    %821 = vmatpush1.msra.mxu0 0.0
    %822 = vmatprep.mubr.f32.mxu0 0.0
    %823 = vmatmul.mubr.f32.gmra.mrb[0].mxu0 %v756
    %v824 = vpop.f32.mrb[0].mxu0
    %v825 = vadd.f32 0.0, %v824
    %v826 = vpop.f32.mrb[0].mxu0
    %827 = vdwg.mxu0
    %v829 = vrot.slane %v825, 6
    %v831 = vadd.f32 %v202, %v829
    %v832 = vxor.u32 %v831, 2147483648
    %v833 = vmul.f32 %v832, 1.442695
    %v834 = vpow.pop %v833
    %v835 = vadd.f32 %v834, 1.0
    %v836 = vrcp.pop %v835
    %v837 = vmul.f32 1.0, %v836
    %v838 = vtanh.pop %v831
    %v840 = vrot.slane %v744, 6
    %v842 = vmul.f32 %v837, %v840
    %844 = vrot.lane.b32.xlu0 %v838, 64
    %v845 = vpop.permute.xlu0 %844
    %v847 = vmul.f32 %v837, %v845
    %849 = vrot.lane.b32.xlu0 %v847, 32
    %v850 = vpop.permute.xlu0 %849
    %v852 = vadd.f32 %v842, %v850
    %v853 = vtanh.pop %v852
    %855 = vrot.lane.b32.xlu0 %v853, 64
    %v856 = vpop.permute.xlu0 %855
    %v858 = vmul.f32 %v837, %v856
    %860 = vrot.lane.b32.xlu0 %v858, 32
    %v861 = vpop.permute.xlu0 %860
    %863 = vst.msk [vmem:[#allocation2 + $0x8] sm:$0xc] %vm422, %v861
    %v864 = vrot.slane %v858, 2
    %865 = vrot.lane.b32.xlu0 %v864, 32
    %v866 = vpop.permute.xlu0 %865
    %v867 = vsel %vm104, %v866, 0
    %869 = vmatprep.subr.mxu0 0.0
    %870 = vmatpush1.msra.mxu0 %v111
    %871 = vmatprep.subr.mxu0 0.0
    %872 = vmatpush1.msra.mxu0 %v112
    %873 = vmatprep.subr.mxu0 0.0
    %874 = vmatpush1.msra.mxu0 %v113
    %875 = vmatprep.subr.mxu0 0.0
    %876 = vmatpush1.msra.mxu0 %v114
    %877 = vmatprep.subr.mxu0 0.0
    %878 = vmatpush1.msra.mxu0 0.0
    %879 = vmatprep.subr.mxu0 0.0
    %880 = vmatpush1.msra.mxu0 0.0
    %881 = vmatprep.subr.mxu0 0.0
    %882 = vmatpush1.msra.mxu0 0.0
    %883 = vmatprep.subr.mxu0 0.0
    %884 = vmatpush1.msra.mxu0 0.0
    %885 = vmatprep.subr.mxu0 0.0
    %886 = vmatpush1.msra.mxu0 0.0
    %887 = vmatprep.subr.mxu0 0.0
    %888 = vmatpush1.msra.mxu0 0.0
    %889 = vmatprep.subr.mxu0 0.0
    %890 = vmatpush1.msra.mxu0 0.0
    %891 = vmatprep.subr.mxu0 0.0
    %892 = vmatpush1.msra.mxu0 0.0
    %893 = vmatprep.subr.mxu0 0.0
    %894 = vmatpush1.msra.mxu0 0.0
    %895 = vmatprep.subr.mxu0 0.0
    %896 = vmatpush1.msra.mxu0 0.0
    %897 = vmatprep.subr.mxu0 0.0
    %898 = vmatpush1.msra.mxu0 0.0
    %899 = vmatprep.subr.mxu0 0.0
    %900 = vmatpush1.msra.mxu0 0.0
    %901 = vmatprep.subr.mxu0 0.0
    %902 = vmatpush1.msra.mxu0 0.0
    %903 = vmatprep.subr.mxu0 0.0
    %904 = vmatpush1.msra.mxu0 0.0
    %905 = vmatprep.subr.mxu0 0.0
    %906 = vmatpush1.msra.mxu0 0.0
    %907 = vmatprep.subr.mxu0 0.0
    %908 = vmatpush1.msra.mxu0 0.0
    %909 = vmatprep.subr.mxu0 0.0
    %910 = vmatpush1.msra.mxu0 0.0
    %911 = vmatprep.subr.mxu0 0.0
    %912 = vmatpush1.msra.mxu0 0.0
    %913 = vmatprep.subr.mxu0 0.0
    %914 = vmatpush1.msra.mxu0 0.0
    %915 = vmatprep.subr.mxu0 0.0
    %916 = vmatpush1.msra.mxu0 0.0
    %917 = vmatprep.subr.mxu0 0.0
    %918 = vmatpush1.msra.mxu0 0.0
    %919 = vmatprep.subr.mxu0 0.0
    %920 = vmatpush1.msra.mxu0 0.0
    %921 = vmatprep.subr.mxu0 0.0
    %922 = vmatpush1.msra.mxu0 0.0
    %923 = vmatprep.subr.mxu0 0.0
    %924 = vmatpush1.msra.mxu0 0.0
    %925 = vmatprep.subr.mxu0 0.0
    %926 = vmatpush1.msra.mxu0 0.0
    %927 = vmatprep.subr.mxu0 0.0
    %928 = vmatpush1.msra.mxu0 0.0
    %929 = vmatprep.subr.mxu0 0.0
    %930 = vmatpush1.msra.mxu0 0.0
    %931 = vmatprep.subr.mxu0 0.0
    %932 = vmatpush1.msra.mxu0 0.0
    %933 = vmatprep.mubr.f32.mxu0 0.0
    %934 = vmatmul.mubr.f32.gmra.mrb[0].mxu0 %v867
    %v935 = vpop.f32.mrb[0].mxu0
    %v936 = vadd.f32 0.0, %v935
    %v937 = vpop.f32.mrb[0].mxu0
    %938 = vdwg.mxu0
    %v940 = vrot.slane %v936, 4
    %v942 = vadd.f32 %v202, %v940
    %v943 = vxor.u32 %v942, 2147483648
    %v944 = vmul.f32 %v943, 1.442695
    %v945 = vpow.pop %v944
    %v946 = vadd.f32 %v945, 1.0
    %v947 = vrcp.pop %v946
    %v948 = vmul.f32 1.0, %v947
    %v949 = vtanh.pop %v942
    %v951 = vrot.slane %v852, 6
    %v953 = vmul.f32 %v948, %v951
    %955 = vrot.lane.b32.xlu0 %v949, 64
    %v956 = vpop.permute.xlu0 %955
    %v958 = vmul.f32 %v948, %v956
    %960 = vrot.lane.b32.xlu0 %v958, 32
    %v961 = vpop.permute.xlu0 %960
    %v963 = vadd.f32 %v953, %v961
    %v964 = vtanh.pop %v963
    %966 = vrot.lane.b32.xlu0 %v964, 64
    %v967 = vpop.permute.xlu0 %966
    %v969 = vmul.f32 %v948, %v967
    %971 = vrot.lane.b32.xlu0 %v969, 32
    %v972 = vpop.permute.xlu0 %971
    %974 = vst.msk [vmem:[#allocation2 + $0x8] sm:$0x30] %vm534, %v972
    %v975 = vrot.slane %v969, 4
    %976 = vrot.lane.b32.xlu0 %v975, 32
    %v977 = vpop.permute.xlu0 %976
    %v978 = vsel %vm104, %v977, 0
    %980 = vmatprep.subr.mxu0 0.0
    %981 = vmatpush1.msra.mxu0 %v111
    %982 = vmatprep.subr.mxu0 0.0
    %983 = vmatpush1.msra.mxu0 %v112
    %984 = vmatprep.subr.mxu0 0.0
    %985 = vmatpush1.msra.mxu0 %v113
    %986 = vmatprep.subr.mxu0 0.0
    %987 = vmatpush1.msra.mxu0 %v114
    %988 = vmatprep.subr.mxu0 0.0
    %989 = vmatpush1.msra.mxu0 0.0
    %990 = vmatprep.subr.mxu0 0.0
    %991 = vmatpush1.msra.mxu0 0.0
    %992 = vmatprep.subr.mxu0 0.0
    %993 = vmatpush1.msra.mxu0 0.0
    %994 = vmatprep.subr.mxu0 0.0
    %995 = vmatpush1.msra.mxu0 0.0
    %996 = vmatprep.subr.mxu0 0.0
    %997 = vmatpush1.msra.mxu0 0.0
    %998 = vmatprep.subr.mxu0 0.0
    %999 = vmatpush1.msra.mxu0 0.0
    %1000 = vmatprep.subr.mxu0 0.0
    %1001 = vmatpush1.msra.mxu0 0.0
    %1002 = vmatprep.subr.mxu0 0.0
    %1003 = vmatpush1.msra.mxu0 0.0
    %1004 = vmatprep.subr.mxu0 0.0
    %1005 = vmatpush1.msra.mxu0 0.0
    %1006 = vmatprep.subr.mxu0 0.0
    %1007 = vmatpush1.msra.mxu0 0.0
    %1008 = vmatprep.subr.mxu0 0.0
    %1009 = vmatpush1.msra.mxu0 0.0
    %1010 = vmatprep.subr.mxu0 0.0
    %1011 = vmatpush1.msra.mxu0 0.0
    %1012 = vmatprep.subr.mxu0 0.0
    %1013 = vmatpush1.msra.mxu0 0.0
    %1014 = vmatprep.subr.mxu0 0.0
    %1015 = vmatpush1.msra.mxu0 0.0
    %1016 = vmatprep.subr.mxu0 0.0
    %1017 = vmatpush1.msra.mxu0 0.0
    %1018 = vmatprep.subr.mxu0 0.0
    %1019 = vmatpush1.msra.mxu0 0.0
    %1020 = vmatprep.subr.mxu0 0.0
    %1021 = vmatpush1.msra.mxu0 0.0
    %1022 = vmatprep.subr.mxu0 0.0
    %1023 = vmatpush1.msra.mxu0 0.0
    %1024 = vmatprep.subr.mxu0 0.0
    %1025 = vmatpush1.msra.mxu0 0.0
    %1026 = vmatprep.subr.mxu0 0.0
    %1027 = vmatpush1.msra.mxu0 0.0
    %1028 = vmatprep.subr.mxu0 0.0
    %1029 = vmatpush1.msra.mxu0 0.0
    %1030 = vmatprep.subr.mxu0 0.0
    %1031 = vmatpush1.msra.mxu0 0.0
    %1032 = vmatprep.subr.mxu0 0.0
    %1033 = vmatpush1.msra.mxu0 0.0
    %1034 = vmatprep.subr.mxu0 0.0
    %1035 = vmatpush1.msra.mxu0 0.0
    %1036 = vmatprep.subr.mxu0 0.0
    %1037 = vmatpush1.msra.mxu0 0.0
    %1038 = vmatprep.subr.mxu0 0.0
    %1039 = vmatpush1.msra.mxu0 0.0
    %1040 = vmatprep.subr.mxu0 0.0
    %1041 = vmatpush1.msra.mxu0 0.0
    %1042 = vmatprep.subr.mxu0 0.0
    %1043 = vmatpush1.msra.mxu0 0.0
    %1044 = vmatprep.mubr.f32.mxu0 0.0
    %1045 = vmatmul.mubr.f32.gmra.mrb[0].mxu0 %v978
    %v1046 = vpop.f32.mrb[0].mxu0
    %v1047 = vadd.f32 0.0, %v1046
    %v1048 = vpop.f32.mrb[0].mxu0
    %1049 = vdwg.mxu0
    %v1051 = vrot.slane %v1047, 2
    %v1053 = vadd.f32 %v202, %v1051
    %v1054 = vxor.u32 %v1053, 2147483648
    %v1055 = vmul.f32 %v1054, 1.442695
    %v1056 = vpow.pop %v1055
    %v1057 = vadd.f32 %v1056, 1.0
    %v1058 = vrcp.pop %v1057
    %v1059 = vmul.f32 1.0, %v1058
    %v1060 = vtanh.pop %v1053
    %v1062 = vrot.slane %v963, 6
    %v1064 = vmul.f32 %v1059, %v1062
    %1066 = vrot.lane.b32.xlu0 %v1060, 64
    %v1067 = vpop.permute.xlu0 %1066
    %v1069 = vmul.f32 %v1059, %v1067
    %1071 = vrot.lane.b32.xlu0 %v1069, 32
    %v1072 = vpop.permute.xlu0 %1071
    %v1074 = vadd.f32 %v1064, %v1072
    %v1075 = vtanh.pop %v1074
    %1077 = vrot.lane.b32.xlu0 %v1075, 64
    %v1078 = vpop.permute.xlu0 %1077
    %v1080 = vmul.f32 %v1059, %v1078
    %1082 = vrot.lane.b32.xlu0 %v1080, 32
    %v1083 = vpop.permute.xlu0 %1082
    %1085 = vst.msk [vmem:[#allocation2 + $0x8] sm:$0xc0] %vm646, %v1083
    %1086 = vst.msk [vmem:[#allocation13 - $0x6] sm:$0xc0] %vm646, %v1083
    %1088 = vrot.lane.b32.xlu0 %v1074, 96
    %v1089 = vpop.permute.xlu0 %1088
    %1091 = vst.msk [vmem:[#allocation15 - $0x6] sm:$0xc0] %vm646, %v1089
    %s1092 = scalar_lea.vmem [#allocation8], 32
    %v1093 = vld [vmem:[%s1092] sm:$0xff]
    %v1094 = vld [vmem:[%s1092 + $0x8] sm:$0xff]
    %v1095 = vld [vmem:[%s1092 + $0x10] sm:$0xff]
    %v1096 = vld [vmem:[%s1092 + $0x18] sm:$0xff]
    %s1097 = scalar_lea.vmem [#allocation9], 32
    %v1098 = vld [vmem:[%s1097] sm:$0xff]
    %v1099 = vld [vmem:[%s1097 + $0x8] sm:$0xff]
    %v1100 = vld [vmem:[%s1097 + $0x10] sm:$0xff]
    %v1101 = vld [vmem:[%s1097 + $0x18] sm:$0xff]
    %s1102 = scalar_lea.vmem %s5, 1
    %v1103 = vld [vmem:[%s1102] sm:$0x1]
    %v1104 = vld [vmem:[#allocation2] sm:$0xff]
    %v1105 = vld [vmem:[#allocation2 + $0x8] sm:$0xff]
    %v1107 = vlaneseq
    %v1108 = vshrl.u32 %v1107, 7
    %v1109 = vsub.s32 0, %v1108
    %v1110 = vrot.slane %v1103, %v1109
    %v1113 = vsel %vm104, %v1104, 0
    %v1116 = vsel %vm104, %v1105, 0
    %1118 = vmatprep.subr.mxu0 0.0
    %1119 = vmatpush1.msra.mxu0 %v1093
    %1120 = vmatprep.subr.mxu0 0.0
    %1121 = vmatpush1.msra.mxu0 %v1094
    %1122 = vmatprep.subr.mxu0 0.0
    %1123 = vmatpush1.msra.mxu0 %v1095
    %1124 = vmatprep.subr.mxu0 0.0
    %1125 = vmatpush1.msra.mxu0 %v1096
    %1126 = vmatprep.subr.mxu0 0.0
    %1127 = vmatpush1.msra.mxu0 0.0
    %1128 = vmatprep.subr.mxu0 0.0
    %1129 = vmatpush1.msra.mxu0 0.0
    %1130 = vmatprep.subr.mxu0 0.0
    %1131 = vmatpush1.msra.mxu0 0.0
    %1132 = vmatprep.subr.mxu0 0.0
    %1133 = vmatpush1.msra.mxu0 0.0
    %1134 = vmatprep.subr.mxu0 0.0
    %1135 = vmatpush1.msra.mxu0 0.0
    %1136 = vmatprep.subr.mxu0 0.0
    %1137 = vmatpush1.msra.mxu0 0.0
    %1138 = vmatprep.subr.mxu0 0.0
    %1139 = vmatpush1.msra.mxu0 0.0
    %1140 = vmatprep.subr.mxu0 0.0
    %1141 = vmatpush1.msra.mxu0 0.0
    %1142 = vmatprep.subr.mxu0 0.0
    %1143 = vmatpush1.msra.mxu0 0.0
    %1144 = vmatprep.subr.mxu0 0.0
    %1145 = vmatpush1.msra.mxu0 0.0
    %1146 = vmatprep.subr.mxu0 0.0
    %1147 = vmatpush1.msra.mxu0 0.0
    %1148 = vmatprep.subr.mxu0 0.0
    %1149 = vmatpush1.msra.mxu0 0.0
    %1150 = vmatprep.subr.mxu0 0.0
    %1151 = vmatpush1.msra.mxu0 0.0
    %1152 = vmatprep.subr.mxu0 0.0
    %1153 = vmatpush1.msra.mxu0 0.0
    %1154 = vmatprep.subr.mxu0 0.0
    %1155 = vmatpush1.msra.mxu0 0.0
    %1156 = vmatprep.subr.mxu0 0.0
    %1157 = vmatpush1.msra.mxu0 0.0
    %1158 = vmatprep.subr.mxu0 0.0
    %1159 = vmatpush1.msra.mxu0 0.0
    %1160 = vmatprep.subr.mxu0 0.0
    %1161 = vmatpush1.msra.mxu0 0.0
    %1162 = vmatprep.subr.mxu0 0.0
    %1163 = vmatpush1.msra.mxu0 0.0
    %1164 = vmatprep.subr.mxu0 0.0
    %1165 = vmatpush1.msra.mxu0 0.0
    %1166 = vmatprep.subr.mxu0 0.0
    %1167 = vmatpush1.msra.mxu0 0.0
    %1168 = vmatprep.subr.mxu0 0.0
    %1169 = vmatpush1.msra.mxu0 0.0
    %1170 = vmatprep.subr.mxu0 0.0
    %1171 = vmatpush1.msra.mxu0 0.0
    %1172 = vmatprep.subr.mxu0 0.0
    %1173 = vmatpush1.msra.mxu0 0.0
    %1174 = vmatprep.subr.mxu0 0.0
    %1175 = vmatpush1.msra.mxu0 0.0
    %1176 = vmatprep.subr.mxu0 0.0
    %1177 = vmatpush1.msra.mxu0 0.0
    %1178 = vmatprep.subr.mxu0 0.0
    %1179 = vmatpush1.msra.mxu0 0.0
    %1180 = vmatprep.subr.mxu0 0.0
    %1181 = vmatpush1.msra.mxu0 0.0
    %1182 = vmatprep.mubr.f32.mxu0 0.0
    %1183 = vmatmul.mubr.f32.gmra.mrb[0].mxu0 %v1113
    %v1184 = vpop.f32.mrb[0].mxu0
    %v1185 = vadd.f32 %v1110, %v1184
    %v1186 = vpop.f32.mrb[0].mxu0
    %1187 = vmatprep.mubr.f32.mxu0 0.0
    %1188 = vmatmul.mubr.f32.gmra.mrb[0].mxu0 %v1116
    %v1189 = vpop.f32.mrb[0].mxu0
    %v1190 = vadd.f32 %v1110, %v1189
    %v1191 = vpop.f32.mrb[0].mxu0
    %1192 = vdwg.mxu0
    %s1193 = scalar_lea.vmem [#allocation6], 2
    %v1194 = vld [vmem:[%s1193] sm:$0x3]
    %s1195 = scalar_lea.vmem %s2, 2
    %v1196 = vld [vmem:[%s1195] sm:$0x3]
    %v1198 = vsel %vm104, %v1194, 0
    %1200 = vmatprep.subr.mxu0 0.0
    %1201 = vmatpush1.msra.mxu0 %v1098
    %1202 = vmatprep.subr.mxu0 0.0
    %1203 = vmatpush1.msra.mxu0 %v1099
    %1204 = vmatprep.subr.mxu0 0.0
    %1205 = vmatpush1.msra.mxu0 %v1100
    %1206 = vmatprep.subr.mxu0 0.0
    %1207 = vmatpush1.msra.mxu0 %v1101
    %1208 = vmatprep.subr.mxu0 0.0
    %1209 = vmatpush1.msra.mxu0 0.0
    %1210 = vmatprep.subr.mxu0 0.0
    %1211 = vmatpush1.msra.mxu0 0.0
    %1212 = vmatprep.subr.mxu0 0.0
    %1213 = vmatpush1.msra.mxu0 0.0
    %1214 = vmatprep.subr.mxu0 0.0
    %1215 = vmatpush1.msra.mxu0 0.0
    %1216 = vmatprep.subr.mxu0 0.0
    %1217 = vmatpush1.msra.mxu0 0.0
    %1218 = vmatprep.subr.mxu0 0.0
    %1219 = vmatpush1.msra.mxu0 0.0
    %1220 = vmatprep.subr.mxu0 0.0
    %1221 = vmatpush1.msra.mxu0 0.0
    %1222 = vmatprep.subr.mxu0 0.0
    %1223 = vmatpush1.msra.mxu0 0.0
    %1224 = vmatprep.subr.mxu0 0.0
    %1225 = vmatpush1.msra.mxu0 0.0
    %1226 = vmatprep.subr.mxu0 0.0
    %1227 = vmatpush1.msra.mxu0 0.0
    %1228 = vmatprep.subr.mxu0 0.0
    %1229 = vmatpush1.msra.mxu0 0.0
    %1230 = vmatprep.subr.mxu0 0.0
    %1231 = vmatpush1.msra.mxu0 0.0
    %1232 = vmatprep.subr.mxu0 0.0
    %1233 = vmatpush1.msra.mxu0 0.0
    %1234 = vmatprep.subr.mxu0 0.0
    %1235 = vmatpush1.msra.mxu0 0.0
    %1236 = vmatprep.subr.mxu0 0.0
    %1237 = vmatpush1.msra.mxu0 0.0
    %1238 = vmatprep.subr.mxu0 0.0
    %1239 = vmatpush1.msra.mxu0 0.0
    %1240 = vmatprep.subr.mxu0 0.0
    %1241 = vmatpush1.msra.mxu0 0.0
    %1242 = vmatprep.subr.mxu0 0.0
    %1243 = vmatpush1.msra.mxu0 0.0
    %1244 = vmatprep.subr.mxu0 0.0
    %1245 = vmatpush1.msra.mxu0 0.0
    %1246 = vmatprep.subr.mxu0 0.0
    %1247 = vmatpush1.msra.mxu0 0.0
    %1248 = vmatprep.subr.mxu0 0.0
    %1249 = vmatpush1.msra.mxu0 0.0
    %1250 = vmatprep.subr.mxu0 0.0
    %1251 = vmatpush1.msra.mxu0 0.0
    %1252 = vmatprep.subr.mxu0 0.0
    %1253 = vmatpush1.msra.mxu0 0.0
    %1254 = vmatprep.subr.mxu0 0.0
    %1255 = vmatpush1.msra.mxu0 0.0
    %1256 = vmatprep.subr.mxu0 0.0
    %1257 = vmatpush1.msra.mxu0 0.0
    %1258 = vmatprep.subr.mxu0 0.0
    %1259 = vmatpush1.msra.mxu0 0.0
    %1260 = vmatprep.subr.mxu0 0.0
    %1261 = vmatpush1.msra.mxu0 0.0
    %1262 = vmatprep.subr.mxu0 0.0
    %1263 = vmatpush1.msra.mxu0 0.0
    %1264 = vmatprep.mubr.f32.mxu0 0.0
    %1265 = vmatmul.mubr.f32.gmra.mrb[0].mxu0 %v1198
    %v1266 = vpop.f32.mrb[0].mxu0
    %v1267 = vadd.f32 0.0, %v1266
    %v1268 = vpop.f32.mrb[0].mxu0
    %1269 = vdwg.mxu0
    %v1270 = vadd.f32 %v1185, %v1267
    %v1271 = vxor.u32 %v1270, 2147483648
    %v1272 = vmul.f32 %v1271, 1.442695
    %v1273 = vpow.pop %v1272
    %v1274 = vadd.f32 %v1273, 1.0
    %v1275 = vrcp.pop %v1274
    %v1276 = vmul.f32 1.0, %v1275
    %v1277 = vtanh.pop %v1270
    %1279 = vrot.lane.b32.xlu0 %v1196, 32
    %v1280 = vpop.permute.xlu0 %1279
    %v1282 = vmul.f32 %v1276, %v1280
    %1284 = vrot.lane.b32.xlu0 %v1277, 64
    %v1285 = vpop.permute.xlu0 %1284
    %v1287 = vmul.f32 %v1276, %v1285
    %1289 = vrot.lane.b32.xlu0 %v1287, 32
    %v1290 = vpop.permute.xlu0 %1289
    %v1292 = vadd.f32 %v1282, %v1290
    %v1293 = vtanh.pop %v1292
    %1295 = vrot.lane.b32.xlu0 %v1293, 64
    %v1296 = vpop.permute.xlu0 %1295
    %v1298 = vmul.f32 %v1276, %v1296
    %1300 = vrot.lane.b32.xlu0 %v1298, 32
    %v1301 = vpop.permute.xlu0 %1300
    %1303 = vst.msk [vmem:[#allocation2] sm:$0x3] %vm313, %v1301
    %v1304 = vsel %vm104, %v1301, 0
    %1306 = vmatprep.subr.mxu0 0.0
    %1307 = vmatpush1.msra.mxu0 %v1098
    %1308 = vmatprep.subr.mxu0 0.0
    %1309 = vmatpush1.msra.mxu0 %v1099
    %1310 = vmatprep.subr.mxu0 0.0
    %1311 = vmatpush1.msra.mxu0 %v1100
    %1312 = vmatprep.subr.mxu0 0.0
    %1313 = vmatpush1.msra.mxu0 %v1101
    %1314 = vmatprep.subr.mxu0 0.0
    %1315 = vmatpush1.msra.mxu0 0.0
    %1316 = vmatprep.subr.mxu0 0.0
    %1317 = vmatpush1.msra.mxu0 0.0
    %1318 = vmatprep.subr.mxu0 0.0
    %1319 = vmatpush1.msra.mxu0 0.0
    %1320 = vmatprep.subr.mxu0 0.0
    %1321 = vmatpush1.msra.mxu0 0.0
    %1322 = vmatprep.subr.mxu0 0.0
    %1323 = vmatpush1.msra.mxu0 0.0
    %1324 = vmatprep.subr.mxu0 0.0
    %1325 = vmatpush1.msra.mxu0 0.0
    %1326 = vmatprep.subr.mxu0 0.0
    %1327 = vmatpush1.msra.mxu0 0.0
    %1328 = vmatprep.subr.mxu0 0.0
    %1329 = vmatpush1.msra.mxu0 0.0
    %1330 = vmatprep.subr.mxu0 0.0
    %1331 = vmatpush1.msra.mxu0 0.0
    %1332 = vmatprep.subr.mxu0 0.0
    %1333 = vmatpush1.msra.mxu0 0.0
    %1334 = vmatprep.subr.mxu0 0.0
    %1335 = vmatpush1.msra.mxu0 0.0
    %1336 = vmatprep.subr.mxu0 0.0
    %1337 = vmatpush1.msra.mxu0 0.0
    %1338 = vmatprep.subr.mxu0 0.0
    %1339 = vmatpush1.msra.mxu0 0.0
    %1340 = vmatprep.subr.mxu0 0.0
    %1341 = vmatpush1.msra.mxu0 0.0
    %1342 = vmatprep.subr.mxu0 0.0
    %1343 = vmatpush1.msra.mxu0 0.0
    %1344 = vmatprep.subr.mxu0 0.0
    %1345 = vmatpush1.msra.mxu0 0.0
    %1346 = vmatprep.subr.mxu0 0.0
    %1347 = vmatpush1.msra.mxu0 0.0
    %1348 = vmatprep.subr.mxu0 0.0
    %1349 = vmatpush1.msra.mxu0 0.0
    %1350 = vmatprep.subr.mxu0 0.0
    %1351 = vmatpush1.msra.mxu0 0.0
    %1352 = vmatprep.subr.mxu0 0.0
    %1353 = vmatpush1.msra.mxu0 0.0
    %1354 = vmatprep.subr.mxu0 0.0
    %1355 = vmatpush1.msra.mxu0 0.0
    %1356 = vmatprep.subr.mxu0 0.0
    %1357 = vmatpush1.msra.mxu0 0.0
    %1358 = vmatprep.subr.mxu0 0.0
    %1359 = vmatpush1.msra.mxu0 0.0
    %1360 = vmatprep.subr.mxu0 0.0
    %1361 = vmatpush1.msra.mxu0 0.0
    %1362 = vmatprep.subr.mxu0 0.0
    %1363 = vmatpush1.msra.mxu0 0.0
    %1364 = vmatprep.subr.mxu0 0.0
    %1365 = vmatpush1.msra.mxu0 0.0
    %1366 = vmatprep.subr.mxu0 0.0
    %1367 = vmatpush1.msra.mxu0 0.0
    %1368 = vmatprep.subr.mxu0 0.0
    %1369 = vmatpush1.msra.mxu0 0.0
    %1370 = vmatprep.mubr.f32.mxu0 0.0
    %1371 = vmatmul.mubr.f32.gmra.mrb[0].mxu0 %v1304
    %v1372 = vpop.f32.mrb[0].mxu0
    %v1373 = vadd.f32 0.0, %v1372
    %v1374 = vpop.f32.mrb[0].mxu0
    %1375 = vdwg.mxu0
    %v1377 = vrot.slane %v1373, 6
    %v1379 = vadd.f32 %v1185, %v1377
    %v1380 = vxor.u32 %v1379, 2147483648
    %v1381 = vmul.f32 %v1380, 1.442695
    %v1382 = vpow.pop %v1381
    %v1383 = vadd.f32 %v1382, 1.0
    %v1384 = vrcp.pop %v1383
    %v1385 = vmul.f32 1.0, %v1384
    %v1386 = vtanh.pop %v1379
    %v1388 = vrot.slane %v1292, 6
    %v1390 = vmul.f32 %v1385, %v1388
    %1392 = vrot.lane.b32.xlu0 %v1386, 64
    %v1393 = vpop.permute.xlu0 %1392
    %v1395 = vmul.f32 %v1385, %v1393
    %1397 = vrot.lane.b32.xlu0 %v1395, 32
    %v1398 = vpop.permute.xlu0 %1397
    %v1400 = vadd.f32 %v1390, %v1398
    %v1401 = vtanh.pop %v1400
    %1403 = vrot.lane.b32.xlu0 %v1401, 64
    %v1404 = vpop.permute.xlu0 %1403
    %v1406 = vmul.f32 %v1385, %v1404
    %1408 = vrot.lane.b32.xlu0 %v1406, 32
    %v1409 = vpop.permute.xlu0 %1408
    %1411 = vst.msk [vmem:[#allocation2] sm:$0xc] %vm422, %v1409
    %v1412 = vrot.slane %v1406, 2
    %1413 = vrot.lane.b32.xlu0 %v1412, 32
    %v1414 = vpop.permute.xlu0 %1413
    %v1415 = vsel %vm104, %v1414, 0
    %1417 = vmatprep.subr.mxu0 0.0
    %1418 = vmatpush1.msra.mxu0 %v1098
    %1419 = vmatprep.subr.mxu0 0.0
    %1420 = vmatpush1.msra.mxu0 %v1099
    %1421 = vmatprep.subr.mxu0 0.0
    %1422 = vmatpush1.msra.mxu0 %v1100
    %1423 = vmatprep.subr.mxu0 0.0
    %1424 = vmatpush1.msra.mxu0 %v1101
    %1425 = vmatprep.subr.mxu0 0.0
    %1426 = vmatpush1.msra.mxu0 0.0
    %1427 = vmatprep.subr.mxu0 0.0
    %1428 = vmatpush1.msra.mxu0 0.0
    %1429 = vmatprep.subr.mxu0 0.0
    %1430 = vmatpush1.msra.mxu0 0.0
    %1431 = vmatprep.subr.mxu0 0.0
    %1432 = vmatpush1.msra.mxu0 0.0
    %1433 = vmatprep.subr.mxu0 0.0
    %1434 = vmatpush1.msra.mxu0 0.0
    %1435 = vmatprep.subr.mxu0 0.0
    %1436 = vmatpush1.msra.mxu0 0.0
    %1437 = vmatprep.subr.mxu0 0.0
    %1438 = vmatpush1.msra.mxu0 0.0
    %1439 = vmatprep.subr.mxu0 0.0
    %1440 = vmatpush1.msra.mxu0 0.0
    %1441 = vmatprep.subr.mxu0 0.0
    %1442 = vmatpush1.msra.mxu0 0.0
    %1443 = vmatprep.subr.mxu0 0.0
    %1444 = vmatpush1.msra.mxu0 0.0
    %1445 = vmatprep.subr.mxu0 0.0
    %1446 = vmatpush1.msra.mxu0 0.0
    %1447 = vmatprep.subr.mxu0 0.0
    %1448 = vmatpush1.msra.mxu0 0.0
    %1449 = vmatprep.subr.mxu0 0.0
    %1450 = vmatpush1.msra.mxu0 0.0
    %1451 = vmatprep.subr.mxu0 0.0
    %1452 = vmatpush1.msra.mxu0 0.0
    %1453 = vmatprep.subr.mxu0 0.0
    %1454 = vmatpush1.msra.mxu0 0.0
    %1455 = vmatprep.subr.mxu0 0.0
    %1456 = vmatpush1.msra.mxu0 0.0
    %1457 = vmatprep.subr.mxu0 0.0
    %1458 = vmatpush1.msra.mxu0 0.0
    %1459 = vmatprep.subr.mxu0 0.0
    %1460 = vmatpush1.msra.mxu0 0.0
    %1461 = vmatprep.subr.mxu0 0.0
    %1462 = vmatpush1.msra.mxu0 0.0
    %1463 = vmatprep.subr.mxu0 0.0
    %1464 = vmatpush1.msra.mxu0 0.0
    %1465 = vmatprep.subr.mxu0 0.0
    %1466 = vmatpush1.msra.mxu0 0.0
    %1467 = vmatprep.subr.mxu0 0.0
    %1468 = vmatpush1.msra.mxu0 0.0
    %1469 = vmatprep.subr.mxu0 0.0
    %1470 = vmatpush1.msra.mxu0 0.0
    %1471 = vmatprep.subr.mxu0 0.0
    %1472 = vmatpush1.msra.mxu0 0.0
    %1473 = vmatprep.subr.mxu0 0.0
    %1474 = vmatpush1.msra.mxu0 0.0
    %1475 = vmatprep.subr.mxu0 0.0
    %1476 = vmatpush1.msra.mxu0 0.0
    %1477 = vmatprep.subr.mxu0 0.0
    %1478 = vmatpush1.msra.mxu0 0.0
    %1479 = vmatprep.subr.mxu0 0.0
    %1480 = vmatpush1.msra.mxu0 0.0
    %1481 = vmatprep.mubr.f32.mxu0 0.0
    %1482 = vmatmul.mubr.f32.gmra.mrb[0].mxu0 %v1415
    %v1483 = vpop.f32.mrb[0].mxu0
    %v1484 = vadd.f32 0.0, %v1483
    %v1485 = vpop.f32.mrb[0].mxu0
    %1486 = vdwg.mxu0
    %v1488 = vrot.slane %v1484, 4
    %v1490 = vadd.f32 %v1185, %v1488
    %v1491 = vxor.u32 %v1490, 2147483648
    %v1492 = vmul.f32 %v1491, 1.442695
    %v1493 = vpow.pop %v1492
    %v1494 = vadd.f32 %v1493, 1.0
    %v1495 = vrcp.pop %v1494
    %v1496 = vmul.f32 1.0, %v1495
    %v1497 = vtanh.pop %v1490
    %v1499 = vrot.slane %v1400, 6
    %v1501 = vmul.f32 %v1496, %v1499
    %1503 = vrot.lane.b32.xlu0 %v1497, 64
    %v1504 = vpop.permute.xlu0 %1503
    %v1506 = vmul.f32 %v1496, %v1504
    %1508 = vrot.lane.b32.xlu0 %v1506, 32
    %v1509 = vpop.permute.xlu0 %1508
    %v1511 = vadd.f32 %v1501, %v1509
    %v1512 = vtanh.pop %v1511
    %1514 = vrot.lane.b32.xlu0 %v1512, 64
    %v1515 = vpop.permute.xlu0 %1514
    %v1517 = vmul.f32 %v1496, %v1515
    %1519 = vrot.lane.b32.xlu0 %v1517, 32
    %v1520 = vpop.permute.xlu0 %1519
    %1522 = vst.msk [vmem:[#allocation2] sm:$0x30] %vm534, %v1520
    %v1523 = vrot.slane %v1517, 4
    %1524 = vrot.lane.b32.xlu0 %v1523, 32
    %v1525 = vpop.permute.xlu0 %1524
    %v1526 = vsel %vm104, %v1525, 0
    %1528 = vmatprep.subr.mxu0 0.0
    %1529 = vmatpush1.msra.mxu0 %v1098
    %1530 = vmatprep.subr.mxu0 0.0
    %1531 = vmatpush1.msra.mxu0 %v1099
    %1532 = vmatprep.subr.mxu0 0.0
    %1533 = vmatpush1.msra.mxu0 %v1100
    %1534 = vmatprep.subr.mxu0 0.0
    %1535 = vmatpush1.msra.mxu0 %v1101
    %1536 = vmatprep.subr.mxu0 0.0
    %1537 = vmatpush1.msra.mxu0 0.0
    %1538 = vmatprep.subr.mxu0 0.0
    %1539 = vmatpush1.msra.mxu0 0.0
    %1540 = vmatprep.subr.mxu0 0.0
    %1541 = vmatpush1.msra.mxu0 0.0
    %1542 = vmatprep.subr.mxu0 0.0
    %1543 = vmatpush1.msra.mxu0 0.0
    %1544 = vmatprep.subr.mxu0 0.0
    %1545 = vmatpush1.msra.mxu0 0.0
    %1546 = vmatprep.subr.mxu0 0.0
    %1547 = vmatpush1.msra.mxu0 0.0
    %1548 = vmatprep.subr.mxu0 0.0
    %1549 = vmatpush1.msra.mxu0 0.0
    %1550 = vmatprep.subr.mxu0 0.0
    %1551 = vmatpush1.msra.mxu0 0.0
    %1552 = vmatprep.subr.mxu0 0.0
    %1553 = vmatpush1.msra.mxu0 0.0
    %1554 = vmatprep.subr.mxu0 0.0
    %1555 = vmatpush1.msra.mxu0 0.0
    %1556 = vmatprep.subr.mxu0 0.0
    %1557 = vmatpush1.msra.mxu0 0.0
    %1558 = vmatprep.subr.mxu0 0.0
    %1559 = vmatpush1.msra.mxu0 0.0
    %1560 = vmatprep.subr.mxu0 0.0
    %1561 = vmatpush1.msra.mxu0 0.0
    %1562 = vmatprep.subr.mxu0 0.0
    %1563 = vmatpush1.msra.mxu0 0.0
    %1564 = vmatprep.subr.mxu0 0.0
    %1565 = vmatpush1.msra.mxu0 0.0
    %1566 = vmatprep.subr.mxu0 0.0
    %1567 = vmatpush1.msra.mxu0 0.0
    %1568 = vmatprep.subr.mxu0 0.0
    %1569 = vmatpush1.msra.mxu0 0.0
    %1570 = vmatprep.subr.mxu0 0.0
    %1571 = vmatpush1.msra.mxu0 0.0
    %1572 = vmatprep.subr.mxu0 0.0
    %1573 = vmatpush1.msra.mxu0 0.0
    %1574 = vmatprep.subr.mxu0 0.0
    %1575 = vmatpush1.msra.mxu0 0.0
    %1576 = vmatprep.subr.mxu0 0.0
    %1577 = vmatpush1.msra.mxu0 0.0
    %1578 = vmatprep.subr.mxu0 0.0
    %1579 = vmatpush1.msra.mxu0 0.0
    %1580 = vmatprep.subr.mxu0 0.0
    %1581 = vmatpush1.msra.mxu0 0.0
    %1582 = vmatprep.subr.mxu0 0.0
    %1583 = vmatpush1.msra.mxu0 0.0
    %1584 = vmatprep.subr.mxu0 0.0
    %1585 = vmatpush1.msra.mxu0 0.0
    %1586 = vmatprep.subr.mxu0 0.0
    %1587 = vmatpush1.msra.mxu0 0.0
    %1588 = vmatprep.subr.mxu0 0.0
    %1589 = vmatpush1.msra.mxu0 0.0
    %1590 = vmatprep.subr.mxu0 0.0
    %1591 = vmatpush1.msra.mxu0 0.0
    %1592 = vmatprep.mubr.f32.mxu0 0.0
    %1593 = vmatmul.mubr.f32.gmra.mrb[0].mxu0 %v1526
    %v1594 = vpop.f32.mrb[0].mxu0
    %v1595 = vadd.f32 0.0, %v1594
    %v1596 = vpop.f32.mrb[0].mxu0
    %1597 = vdwg.mxu0
    %v1599 = vrot.slane %v1595, 2
    %v1601 = vadd.f32 %v1185, %v1599
    %v1602 = vxor.u32 %v1601, 2147483648
    %v1603 = vmul.f32 %v1602, 1.442695
    %v1604 = vpow.pop %v1603
    %v1605 = vadd.f32 %v1604, 1.0
    %v1606 = vrcp.pop %v1605
    %v1607 = vmul.f32 1.0, %v1606
    %v1608 = vtanh.pop %v1601
    %v1610 = vrot.slane %v1511, 6
    %v1612 = vmul.f32 %v1607, %v1610
    %1614 = vrot.lane.b32.xlu0 %v1608, 64
    %v1615 = vpop.permute.xlu0 %1614
    %v1617 = vmul.f32 %v1607, %v1615
    %1619 = vrot.lane.b32.xlu0 %v1617, 32
    %v1620 = vpop.permute.xlu0 %1619
    %v1622 = vadd.f32 %v1612, %v1620
    %v1623 = vtanh.pop %v1622
    %1625 = vrot.lane.b32.xlu0 %v1623, 64
    %v1626 = vpop.permute.xlu0 %1625
    %v1628 = vmul.f32 %v1607, %v1626
    %1630 = vrot.lane.b32.xlu0 %v1628, 32
    %v1631 = vpop.permute.xlu0 %1630
    %1633 = vst.msk [vmem:[#allocation2] sm:$0xc0] %vm646, %v1631
    %v1634 = vrot.slane %v1628, 6
    %1635 = vrot.lane.b32.xlu0 %v1634, 32
    %v1636 = vpop.permute.xlu0 %1635
    %v1637 = vsel %vm104, %v1636, 0
    %1639 = vmatprep.subr.mxu0 0.0
    %1640 = vmatpush1.msra.mxu0 %v1098
    %1641 = vmatprep.subr.mxu0 0.0
    %1642 = vmatpush1.msra.mxu0 %v1099
    %1643 = vmatprep.subr.mxu0 0.0
    %1644 = vmatpush1.msra.mxu0 %v1100
    %1645 = vmatprep.subr.mxu0 0.0
    %1646 = vmatpush1.msra.mxu0 %v1101
    %1647 = vmatprep.subr.mxu0 0.0
    %1648 = vmatpush1.msra.mxu0 0.0
    %1649 = vmatprep.subr.mxu0 0.0
    %1650 = vmatpush1.msra.mxu0 0.0
    %1651 = vmatprep.subr.mxu0 0.0
    %1652 = vmatpush1.msra.mxu0 0.0
    %1653 = vmatprep.subr.mxu0 0.0
    %1654 = vmatpush1.msra.mxu0 0.0
    %1655 = vmatprep.subr.mxu0 0.0
    %1656 = vmatpush1.msra.mxu0 0.0
    %1657 = vmatprep.subr.mxu0 0.0
    %1658 = vmatpush1.msra.mxu0 0.0
    %1659 = vmatprep.subr.mxu0 0.0
    %1660 = vmatpush1.msra.mxu0 0.0
    %1661 = vmatprep.subr.mxu0 0.0
    %1662 = vmatpush1.msra.mxu0 0.0
    %1663 = vmatprep.subr.mxu0 0.0
    %1664 = vmatpush1.msra.mxu0 0.0
    %1665 = vmatprep.subr.mxu0 0.0
    %1666 = vmatpush1.msra.mxu0 0.0
    %1667 = vmatprep.subr.mxu0 0.0
    %1668 = vmatpush1.msra.mxu0 0.0
    %1669 = vmatprep.subr.mxu0 0.0
    %1670 = vmatpush1.msra.mxu0 0.0
    %1671 = vmatprep.subr.mxu0 0.0
    %1672 = vmatpush1.msra.mxu0 0.0
    %1673 = vmatprep.subr.mxu0 0.0
    %1674 = vmatpush1.msra.mxu0 0.0
    %1675 = vmatprep.subr.mxu0 0.0
    %1676 = vmatpush1.msra.mxu0 0.0
    %1677 = vmatprep.subr.mxu0 0.0
    %1678 = vmatpush1.msra.mxu0 0.0
    %1679 = vmatprep.subr.mxu0 0.0
    %1680 = vmatpush1.msra.mxu0 0.0
    %1681 = vmatprep.subr.mxu0 0.0
    %1682 = vmatpush1.msra.mxu0 0.0
    %1683 = vmatprep.subr.mxu0 0.0
    %1684 = vmatpush1.msra.mxu0 0.0
    %1685 = vmatprep.subr.mxu0 0.0
    %1686 = vmatpush1.msra.mxu0 0.0
    %1687 = vmatprep.subr.mxu0 0.0
    %1688 = vmatpush1.msra.mxu0 0.0
    %1689 = vmatprep.subr.mxu0 0.0
    %1690 = vmatpush1.msra.mxu0 0.0
    %1691 = vmatprep.subr.mxu0 0.0
    %1692 = vmatpush1.msra.mxu0 0.0
    %1693 = vmatprep.subr.mxu0 0.0
    %1694 = vmatpush1.msra.mxu0 0.0
    %1695 = vmatprep.subr.mxu0 0.0
    %1696 = vmatpush1.msra.mxu0 0.0
    %1697 = vmatprep.subr.mxu0 0.0
    %1698 = vmatpush1.msra.mxu0 0.0
    %1699 = vmatprep.subr.mxu0 0.0
    %1700 = vmatpush1.msra.mxu0 0.0
    %1701 = vmatprep.subr.mxu0 0.0
    %1702 = vmatpush1.msra.mxu0 0.0
    %1703 = vmatprep.mubr.f32.mxu0 0.0
    %1704 = vmatmul.mubr.f32.gmra.mrb[0].mxu0 %v1637
    %v1705 = vpop.f32.mrb[0].mxu0
    %v1706 = vadd.f32 0.0, %v1705
    %v1707 = vpop.f32.mrb[0].mxu0
    %1708 = vdwg.mxu0
    %v1709 = vadd.f32 %v1190, %v1706
    %v1710 = vxor.u32 %v1709, 2147483648
    %v1711 = vmul.f32 %v1710, 1.442695
    %v1712 = vpow.pop %v1711
    %v1713 = vadd.f32 %v1712, 1.0
    %v1714 = vrcp.pop %v1713
    %v1715 = vmul.f32 1.0, %v1714
    %v1716 = vtanh.pop %v1709
    %v1718 = vrot.slane %v1622, 6
    %v1720 = vmul.f32 %v1715, %v1718
    %1722 = vrot.lane.b32.xlu0 %v1716, 64
    %v1723 = vpop.permute.xlu0 %1722
    %v1725 = vmul.f32 %v1715, %v1723
    %1727 = vrot.lane.b32.xlu0 %v1725, 32
    %v1728 = vpop.permute.xlu0 %1727
    %v1730 = vadd.f32 %v1720, %v1728
    %v1731 = vtanh.pop %v1730
    %1733 = vrot.lane.b32.xlu0 %v1731, 64
    %v1734 = vpop.permute.xlu0 %1733
    %v1736 = vmul.f32 %v1715, %v1734
    %1738 = vrot.lane.b32.xlu0 %v1736, 32
    %v1739 = vpop.permute.xlu0 %1738
    %1741 = vst.msk [vmem:[#allocation2 + $0x8] sm:$0x3] %vm313, %v1739
    %v1742 = vsel %vm104, %v1739, 0
    %1744 = vmatprep.subr.mxu0 0.0
    %1745 = vmatpush1.msra.mxu0 %v1098
    %1746 = vmatprep.subr.mxu0 0.0
    %1747 = vmatpush1.msra.mxu0 %v1099
    %1748 = vmatprep.subr.mxu0 0.0
    %1749 = vmatpush1.msra.mxu0 %v1100
    %1750 = vmatprep.subr.mxu0 0.0
    %1751 = vmatpush1.msra.mxu0 %v1101
    %1752 = vmatprep.subr.mxu0 0.0
    %1753 = vmatpush1.msra.mxu0 0.0
    %1754 = vmatprep.subr.mxu0 0.0
    %1755 = vmatpush1.msra.mxu0 0.0
    %1756 = vmatprep.subr.mxu0 0.0
    %1757 = vmatpush1.msra.mxu0 0.0
    %1758 = vmatprep.subr.mxu0 0.0
    %1759 = vmatpush1.msra.mxu0 0.0
    %1760 = vmatprep.subr.mxu0 0.0
    %1761 = vmatpush1.msra.mxu0 0.0
    %1762 = vmatprep.subr.mxu0 0.0
    %1763 = vmatpush1.msra.mxu0 0.0
    %1764 = vmatprep.subr.mxu0 0.0
    %1765 = vmatpush1.msra.mxu0 0.0
    %1766 = vmatprep.subr.mxu0 0.0
    %1767 = vmatpush1.msra.mxu0 0.0
    %1768 = vmatprep.subr.mxu0 0.0
    %1769 = vmatpush1.msra.mxu0 0.0
    %1770 = vmatprep.subr.mxu0 0.0
    %1771 = vmatpush1.msra.mxu0 0.0
    %1772 = vmatprep.subr.mxu0 0.0
    %1773 = vmatpush1.msra.mxu0 0.0
    %1774 = vmatprep.subr.mxu0 0.0
    %1775 = vmatpush1.msra.mxu0 0.0
    %1776 = vmatprep.subr.mxu0 0.0
    %1777 = vmatpush1.msra.mxu0 0.0
    %1778 = vmatprep.subr.mxu0 0.0
    %1779 = vmatpush1.msra.mxu0 0.0
    %1780 = vmatprep.subr.mxu0 0.0
    %1781 = vmatpush1.msra.mxu0 0.0
    %1782 = vmatprep.subr.mxu0 0.0
    %1783 = vmatpush1.msra.mxu0 0.0
    %1784 = vmatprep.subr.mxu0 0.0
    %1785 = vmatpush1.msra.mxu0 0.0
    %1786 = vmatprep.subr.mxu0 0.0
    %1787 = vmatpush1.msra.mxu0 0.0
    %1788 = vmatprep.subr.mxu0 0.0
    %1789 = vmatpush1.msra.mxu0 0.0
    %1790 = vmatprep.subr.mxu0 0.0
    %1791 = vmatpush1.msra.mxu0 0.0
    %1792 = vmatprep.subr.mxu0 0.0
    %1793 = vmatpush1.msra.mxu0 0.0
    %1794 = vmatprep.subr.mxu0 0.0
    %1795 = vmatpush1.msra.mxu0 0.0
    %1796 = vmatprep.subr.mxu0 0.0
    %1797 = vmatpush1.msra.mxu0 0.0
    %1798 = vmatprep.subr.mxu0 0.0
    %1799 = vmatpush1.msra.mxu0 0.0
    %1800 = vmatprep.subr.mxu0 0.0
    %1801 = vmatpush1.msra.mxu0 0.0
    %1802 = vmatprep.subr.mxu0 0.0
    %1803 = vmatpush1.msra.mxu0 0.0
    %1804 = vmatprep.subr.mxu0 0.0
    %1805 = vmatpush1.msra.mxu0 0.0
    %1806 = vmatprep.subr.mxu0 0.0
    %1807 = vmatpush1.msra.mxu0 0.0
    %1808 = vmatprep.mubr.f32.mxu0 0.0
    %1809 = vmatmul.mubr.f32.gmra.mrb[0].mxu0 %v1742
    %v1810 = vpop.f32.mrb[0].mxu0
    %v1811 = vadd.f32 0.0, %v1810
    %v1812 = vpop.f32.mrb[0].mxu0
    %1813 = vdwg.mxu0
    %v1815 = vrot.slane %v1811, 6
    %v1817 = vadd.f32 %v1190, %v1815
    %v1818 = vxor.u32 %v1817, 2147483648
    %v1819 = vmul.f32 %v1818, 1.442695
    %v1820 = vpow.pop %v1819
    %v1821 = vadd.f32 %v1820, 1.0
    %v1822 = vrcp.pop %v1821
    %v1823 = vmul.f32 1.0, %v1822
    %v1824 = vtanh.pop %v1817
    %v1826 = vrot.slane %v1730, 6
    %v1828 = vmul.f32 %v1823, %v1826
    %1830 = vrot.lane.b32.xlu0 %v1824, 64
    %v1831 = vpop.permute.xlu0 %1830
    %v1833 = vmul.f32 %v1823, %v1831
    %1835 = vrot.lane.b32.xlu0 %v1833, 32
    %v1836 = vpop.permute.xlu0 %1835
    %v1838 = vadd.f32 %v1828, %v1836
    %v1839 = vtanh.pop %v1838
    %1841 = vrot.lane.b32.xlu0 %v1839, 64
    %v1842 = vpop.permute.xlu0 %1841
    %v1844 = vmul.f32 %v1823, %v1842
    %1846 = vrot.lane.b32.xlu0 %v1844, 32
    %v1847 = vpop.permute.xlu0 %1846
    %1849 = vst.msk [vmem:[#allocation2 + $0x8] sm:$0xc] %vm422, %v1847
    %v1850 = vrot.slane %v1844, 2
    %1851 = vrot.lane.b32.xlu0 %v1850, 32
    %v1852 = vpop.permute.xlu0 %1851
    %v1853 = vsel %vm104, %v1852, 0
    %1855 = vmatprep.subr.mxu0 0.0
    %1856 = vmatpush1.msra.mxu0 %v1098
    %1857 = vmatprep.subr.mxu0 0.0
    %1858 = vmatpush1.msra.mxu0 %v1099
    %1859 = vmatprep.subr.mxu0 0.0
    %1860 = vmatpush1.msra.mxu0 %v1100
    %1861 = vmatprep.subr.mxu0 0.0
    %1862 = vmatpush1.msra.mxu0 %v1101
    %1863 = vmatprep.subr.mxu0 0.0
    %1864 = vmatpush1.msra.mxu0 0.0
    %1865 = vmatprep.subr.mxu0 0.0
    %1866 = vmatpush1.msra.mxu0 0.0
    %1867 = vmatprep.subr.mxu0 0.0
    %1868 = vmatpush1.msra.mxu0 0.0
    %1869 = vmatprep.subr.mxu0 0.0
    %1870 = vmatpush1.msra.mxu0 0.0
    %1871 = vmatprep.subr.mxu0 0.0
    %1872 = vmatpush1.msra.mxu0 0.0
    %1873 = vmatprep.subr.mxu0 0.0
    %1874 = vmatpush1.msra.mxu0 0.0
    %1875 = vmatprep.subr.mxu0 0.0
    %1876 = vmatpush1.msra.mxu0 0.0
    %1877 = vmatprep.subr.mxu0 0.0
    %1878 = vmatpush1.msra.mxu0 0.0
    %1879 = vmatprep.subr.mxu0 0.0
    %1880 = vmatpush1.msra.mxu0 0.0
    %1881 = vmatprep.subr.mxu0 0.0
    %1882 = vmatpush1.msra.mxu0 0.0
    %1883 = vmatprep.subr.mxu0 0.0
    %1884 = vmatpush1.msra.mxu0 0.0
    %1885 = vmatprep.subr.mxu0 0.0
    %1886 = vmatpush1.msra.mxu0 0.0
    %1887 = vmatprep.subr.mxu0 0.0
    %1888 = vmatpush1.msra.mxu0 0.0
    %1889 = vmatprep.subr.mxu0 0.0
    %1890 = vmatpush1.msra.mxu0 0.0
    %1891 = vmatprep.subr.mxu0 0.0
    %1892 = vmatpush1.msra.mxu0 0.0
    %1893 = vmatprep.subr.mxu0 0.0
    %1894 = vmatpush1.msra.mxu0 0.0
    %1895 = vmatprep.subr.mxu0 0.0
    %1896 = vmatpush1.msra.mxu0 0.0
    %1897 = vmatprep.subr.mxu0 0.0
    %1898 = vmatpush1.msra.mxu0 0.0
    %1899 = vmatprep.subr.mxu0 0.0
    %1900 = vmatpush1.msra.mxu0 0.0
    %1901 = vmatprep.subr.mxu0 0.0
    %1902 = vmatpush1.msra.mxu0 0.0
    %1903 = vmatprep.subr.mxu0 0.0
    %1904 = vmatpush1.msra.mxu0 0.0
    %1905 = vmatprep.subr.mxu0 0.0
    %1906 = vmatpush1.msra.mxu0 0.0
    %1907 = vmatprep.subr.mxu0 0.0
    %1908 = vmatpush1.msra.mxu0 0.0
    %1909 = vmatprep.subr.mxu0 0.0
    %1910 = vmatpush1.msra.mxu0 0.0
    %1911 = vmatprep.subr.mxu0 0.0
    %1912 = vmatpush1.msra.mxu0 0.0
    %1913 = vmatprep.subr.mxu0 0.0
    %1914 = vmatpush1.msra.mxu0 0.0
    %1915 = vmatprep.subr.mxu0 0.0
    %1916 = vmatpush1.msra.mxu0 0.0
    %1917 = vmatprep.subr.mxu0 0.0
    %1918 = vmatpush1.msra.mxu0 0.0
    %1919 = vmatprep.mubr.f32.mxu0 0.0
    %1920 = vmatmul.mubr.f32.gmra.mrb[0].mxu0 %v1853
    %v1921 = vpop.f32.mrb[0].mxu0
    %v1922 = vadd.f32 0.0, %v1921
    %v1923 = vpop.f32.mrb[0].mxu0
    %1924 = vdwg.mxu0
    %v1926 = vrot.slane %v1922, 4
    %v1928 = vadd.f32 %v1190, %v1926
    %v1929 = vxor.u32 %v1928, 2147483648
    %v1930 = vmul.f32 %v1929, 1.442695
    %v1931 = vpow.pop %v1930
    %v1932 = vadd.f32 %v1931, 1.0
    %v1933 = vrcp.pop %v1932
    %v1934 = vmul.f32 1.0, %v1933
    %v1935 = vtanh.pop %v1928
    %v1937 = vrot.slane %v1838, 6
    %v1939 = vmul.f32 %v1934, %v1937
    %1941 = vrot.lane.b32.xlu0 %v1935, 64
    %v1942 = vpop.permute.xlu0 %1941
    %v1944 = vmul.f32 %v1934, %v1942
    %1946 = vrot.lane.b32.xlu0 %v1944, 32
    %v1947 = vpop.permute.xlu0 %1946
    %v1949 = vadd.f32 %v1939, %v1947
    %v1950 = vtanh.pop %v1949
    %1952 = vrot.lane.b32.xlu0 %v1950, 64
    %v1953 = vpop.permute.xlu0 %1952
    %v1955 = vmul.f32 %v1934, %v1953
    %1957 = vrot.lane.b32.xlu0 %v1955, 32
    %v1958 = vpop.permute.xlu0 %1957
    %1960 = vst.msk [vmem:[#allocation2 + $0x8] sm:$0x30] %vm534, %v1958
    %v1961 = vrot.slane %v1955, 4
    %1962 = vrot.lane.b32.xlu0 %v1961, 32
    %v1963 = vpop.permute.xlu0 %1962
    %v1964 = vsel %vm104, %v1963, 0
    %1966 = vmatprep.subr.mxu0 0.0
    %1967 = vmatpush1.msra.mxu0 %v1098
    %1968 = vmatprep.subr.mxu0 0.0
    %1969 = vmatpush1.msra.mxu0 %v1099
    %1970 = vmatprep.subr.mxu0 0.0
    %1971 = vmatpush1.msra.mxu0 %v1100
    %1972 = vmatprep.subr.mxu0 0.0
    %1973 = vmatpush1.msra.mxu0 %v1101
    %1974 = vmatprep.subr.mxu0 0.0
    %1975 = vmatpush1.msra.mxu0 0.0
    %1976 = vmatprep.subr.mxu0 0.0
    %1977 = vmatpush1.msra.mxu0 0.0
    %1978 = vmatprep.subr.mxu0 0.0
    %1979 = vmatpush1.msra.mxu0 0.0
    %1980 = vmatprep.subr.mxu0 0.0
    %1981 = vmatpush1.msra.mxu0 0.0
    %1982 = vmatprep.subr.mxu0 0.0
    %1983 = vmatpush1.msra.mxu0 0.0
    %1984 = vmatprep.subr.mxu0 0.0
    %1985 = vmatpush1.msra.mxu0 0.0
    %1986 = vmatprep.subr.mxu0 0.0
    %1987 = vmatpush1.msra.mxu0 0.0
    %1988 = vmatprep.subr.mxu0 0.0
    %1989 = vmatpush1.msra.mxu0 0.0
    %1990 = vmatprep.subr.mxu0 0.0
    %1991 = vmatpush1.msra.mxu0 0.0
    %1992 = vmatprep.subr.mxu0 0.0
    %1993 = vmatpush1.msra.mxu0 0.0
    %1994 = vmatprep.subr.mxu0 0.0
    %1995 = vmatpush1.msra.mxu0 0.0
    %1996 = vmatprep.subr.mxu0 0.0
    %1997 = vmatpush1.msra.mxu0 0.0
    %1998 = vmatprep.subr.mxu0 0.0
    %1999 = vmatpush1.msra.mxu0 0.0
    %2000 = vmatprep.subr.mxu0 0.0
    %2001 = vmatpush1.msra.mxu0 0.0
    %2002 = vmatprep.subr.mxu0 0.0
    %2003 = vmatpush1.msra.mxu0 0.0
    %2004 = vmatprep.subr.mxu0 0.0
    %2005 = vmatpush1.msra.mxu0 0.0
    %2006 = vmatprep.subr.mxu0 0.0
    %2007 = vmatpush1.msra.mxu0 0.0
    %2008 = vmatprep.subr.mxu0 0.0
    %2009 = vmatpush1.msra.mxu0 0.0
    %2010 = vmatprep.subr.mxu0 0.0
    %2011 = vmatpush1.msra.mxu0 0.0
    %2012 = vmatprep.subr.mxu0 0.0
    %2013 = vmatpush1.msra.mxu0 0.0
    %2014 = vmatprep.subr.mxu0 0.0
    %2015 = vmatpush1.msra.mxu0 0.0
    %2016 = vmatprep.subr.mxu0 0.0
    %2017 = vmatpush1.msra.mxu0 0.0
    %2018 = vmatprep.subr.mxu0 0.0
    %2019 = vmatpush1.msra.mxu0 0.0
    %2020 = vmatprep.subr.mxu0 0.0
    %2021 = vmatpush1.msra.mxu0 0.0
    %2022 = vmatprep.subr.mxu0 0.0
    %2023 = vmatpush1.msra.mxu0 0.0
    %2024 = vmatprep.subr.mxu0 0.0
    %2025 = vmatpush1.msra.mxu0 0.0
    %2026 = vmatprep.subr.mxu0 0.0
    %2027 = vmatpush1.msra.mxu0 0.0
    %2028 = vmatprep.subr.mxu0 0.0
    %2029 = vmatpush1.msra.mxu0 0.0
    %2030 = vmatprep.mubr.f32.mxu0 0.0
    %2031 = vmatmul.mubr.f32.gmra.mrb[0].mxu0 %v1964
    %v2032 = vpop.f32.mrb[0].mxu0
    %v2033 = vadd.f32 0.0, %v2032
    %v2034 = vpop.f32.mrb[0].mxu0
    %2035 = vdwg.mxu0
    %v2037 = vrot.slane %v2033, 2
    %v2039 = vadd.f32 %v1190, %v2037
    %v2040 = vxor.u32 %v2039, 2147483648
    %v2041 = vmul.f32 %v2040, 1.442695
    %v2042 = vpow.pop %v2041
    %v2043 = vadd.f32 %v2042, 1.0
    %v2044 = vrcp.pop %v2043
    %v2045 = vmul.f32 1.0, %v2044
    %v2046 = vtanh.pop %v2039
    %v2048 = vrot.slane %v1949, 6
    %v2050 = vmul.f32 %v2045, %v2048
    %2052 = vrot.lane.b32.xlu0 %v2046, 64
    %v2053 = vpop.permute.xlu0 %2052
    %v2055 = vmul.f32 %v2045, %v2053
    %2057 = vrot.lane.b32.xlu0 %v2055, 32
    %v2058 = vpop.permute.xlu0 %2057
    %v2060 = vadd.f32 %v2050, %v2058
    %v2061 = vtanh.pop %v2060
    %2063 = vrot.lane.b32.xlu0 %v2061, 64
    %v2064 = vpop.permute.xlu0 %2063
    %v2066 = vmul.f32 %v2045, %v2064
    %2068 = vrot.lane.b32.xlu0 %v2066, 32
    %v2069 = vpop.permute.xlu0 %2068
    %2071 = vst.msk [vmem:[#allocation2 + $0x8] sm:$0xc0] %vm646, %v2069
    %s2072 = scalar_lea.vmem [#allocation13], 2
    %2073 = vst.msk [vmem:[%s2072 - $0x6] sm:$0xc0] %vm646, %v2069
    %2075 = vrot.lane.b32.xlu0 %v2060, 96
    %v2076 = vpop.permute.xlu0 %2075
    %s2078 = scalar_lea.vmem [#allocation15], 2
    %2079 = vst.msk [vmem:[%s2078 - $0x6] sm:$0xc0] %vm646, %v2076
    %v2080 = vld [vmem:[#allocation2] sm:$0xff]
    %v2081 = vld [vmem:[#allocation2 + $0x8] sm:$0xff]
    %v2082 = vld [vmem:[#allocation11] sm:$0xff]
    %v2083 = vld [vmem:[#allocation11 + $0x8] sm:$0xff]
    %v2084 = vld [vmem:[#allocation11 + $0x10] sm:$0xff]
    %v2085 = vld [vmem:[#allocation11 + $0x18] sm:$0xff]
    %v2086 = vld [vmem:[%s7] sm:$0x1]
    %v2088 = vlaneseq
    %v2089 = vshrl.u32 %v2088, 7
    %v2090 = vsub.s32 0, %v2089
    %v2091 = vrot.slane %v2086, %v2090
    %v2094 = vsel %vm104, %v2080, 0
    %v2097 = vsel %vm104, %v2081, 0
    %2099 = vmatprep.subr.mxu0 0.0
    %2100 = vmatpush1.msra.mxu0 %v2082
    %2101 = vmatprep.subr.mxu0 0.0
    %2102 = vmatpush1.msra.mxu0 %v2083
    %2103 = vmatprep.subr.mxu0 0.0
    %2104 = vmatpush1.msra.mxu0 %v2084
    %2105 = vmatprep.subr.mxu0 0.0
    %2106 = vmatpush1.msra.mxu0 %v2085
    %2107 = vmatprep.subr.mxu0 0.0
    %2108 = vmatpush1.msra.mxu0 0.0
    %2109 = vmatprep.subr.mxu0 0.0
    %2110 = vmatpush1.msra.mxu0 0.0
    %2111 = vmatprep.subr.mxu0 0.0
    %2112 = vmatpush1.msra.mxu0 0.0
    %2113 = vmatprep.subr.mxu0 0.0
    %2114 = vmatpush1.msra.mxu0 0.0
    %2115 = vmatprep.subr.mxu0 0.0
    %2116 = vmatpush1.msra.mxu0 0.0
    %2117 = vmatprep.subr.mxu0 0.0
    %2118 = vmatpush1.msra.mxu0 0.0
    %2119 = vmatprep.subr.mxu0 0.0
    %2120 = vmatpush1.msra.mxu0 0.0
    %2121 = vmatprep.subr.mxu0 0.0
    %2122 = vmatpush1.msra.mxu0 0.0
    %2123 = vmatprep.subr.mxu0 0.0
    %2124 = vmatpush1.msra.mxu0 0.0
    %2125 = vmatprep.subr.mxu0 0.0
    %2126 = vmatpush1.msra.mxu0 0.0
    %2127 = vmatprep.subr.mxu0 0.0
    %2128 = vmatpush1.msra.mxu0 0.0
    %2129 = vmatprep.subr.mxu0 0.0
    %2130 = vmatpush1.msra.mxu0 0.0
    %2131 = vmatprep.subr.mxu0 0.0
    %2132 = vmatpush1.msra.mxu0 0.0
    %2133 = vmatprep.subr.mxu0 0.0
    %2134 = vmatpush1.msra.mxu0 0.0
    %2135 = vmatprep.subr.mxu0 0.0
    %2136 = vmatpush1.msra.mxu0 0.0
    %2137 = vmatprep.subr.mxu0 0.0
    %2138 = vmatpush1.msra.mxu0 0.0
    %2139 = vmatprep.subr.mxu0 0.0
    %2140 = vmatpush1.msra.mxu0 0.0
    %2141 = vmatprep.subr.mxu0 0.0
    %2142 = vmatpush1.msra.mxu0 0.0
    %2143 = vmatprep.subr.mxu0 0.0
    %2144 = vmatpush1.msra.mxu0 0.0
    %2145 = vmatprep.subr.mxu0 0.0
    %2146 = vmatpush1.msra.mxu0 0.0
    %2147 = vmatprep.subr.mxu0 0.0
    %2148 = vmatpush1.msra.mxu0 0.0
    %2149 = vmatprep.subr.mxu0 0.0
    %2150 = vmatpush1.msra.mxu0 0.0
    %2151 = vmatprep.subr.mxu0 0.0
    %2152 = vmatpush1.msra.mxu0 0.0
    %2153 = vmatprep.subr.mxu0 0.0
    %2154 = vmatpush1.msra.mxu0 0.0
    %2155 = vmatprep.subr.mxu0 0.0
    %2156 = vmatpush1.msra.mxu0 0.0
    %2157 = vmatprep.subr.mxu0 0.0
    %2158 = vmatpush1.msra.mxu0 0.0
    %2159 = vmatprep.subr.mxu0 0.0
    %2160 = vmatpush1.msra.mxu0 0.0
    %2161 = vmatprep.subr.mxu0 0.0
    %2162 = vmatpush1.msra.mxu0 0.0
    %2163 = vmatprep.mubr.f32.mxu0 0.0
    %2164 = vmatmul.mubr.f32.gmra.mrb[0].mxu0 %v2094
    %v2165 = vpop.f32.mrb[0].mxu0
    %v2166 = vadd.f32 %v2091, %v2165
    %v2167 = vpop.f32.mrb[0].mxu0
    %2168 = vmatprep.mubr.f32.mxu0 0.0
    %2169 = vmatmul.mubr.f32.gmra.mrb[0].mxu0 %v2097
    %v2170 = vpop.f32.mrb[0].mxu0
    %v2171 = vadd.f32 %v2091, %v2170
    %v2172 = vpop.f32.mrb[0].mxu0
    %2173 = vdwg.mxu0
    %vm2174 = vcmask 523264
    %2175 = vst.msk [vmem:[#allocation12] sm:$0xff] %vm2174, %v2166
    %2176 = vst.msk [vmem:[#allocation12 + $0x8] sm:$0xff] %vm2174, %v2171
    // Predicated region
    $region54: #{tpu_custom_call.1} parent=1 // pred_check
      _
    $region55: #{tpu_custom_call.1} parent=1 // pred_check_branch
      %2178 = sbr.rel (0) target = $region57
    $region56: #{tpu_custom_call.1} parent=1 // pred_region
      %s2180 = ssub.s32 256, 256
      %2181 = vsyncadd [#allocation5], %s2180
      %s2182 = sshll.u32 [#allocation12], 4
      %s2183 = int_to_ptr.vmem [resolvable:$true] %s2182
      %2188 = dma.vmem_to_hbm [thread:$0]  %s2183, 256, %s8, [#allocation5], 128, 128, 8
    $region57: #{tpu_custom_call.1} parent=1 // pred_fallthru
      _
    // Predicated region
    $region58: #{tpu_custom_call.1} parent=1 // pred_check
      _
    $region59: #{tpu_custom_call.1} parent=1 // pred_check_branch
      %2190 = sbr.rel (0) target = $region61
    $region60: #{tpu_custom_call.1} parent=1 // pred_region
      %s2192 = ssub.s32 64, 64
      %2193 = vsyncadd [#allocation14], %s2192
      %s2194 = sshll.u32 [#allocation13], 4
      %s2195 = int_to_ptr.vmem [resolvable:$true] %s2194
      %2200 = dma.vmem_to_hbm [thread:$0]  %s2195, 64, %s9, [#allocation14], 32, 32, 2
    $region61: #{tpu_custom_call.1} parent=1 // pred_fallthru
      _
    // Predicated region
    $region62: #{tpu_custom_call.1} parent=1 // pred_check
      _
    $region63: #{tpu_custom_call.1} parent=1 // pred_check_branch
      %2202 = sbr.rel (0) target = $region65
    $region64: #{tpu_custom_call.1} parent=1 // pred_region
      %s2204 = ssub.s32 64, 64
      %2205 = vsyncadd [#allocation14], %s2204
      %s2206 = sshll.u32 [#allocation15], 4
      %s2207 = int_to_ptr.vmem [resolvable:$true] %s2206
      %2212 = dma.vmem_to_hbm [thread:$0]  %s2207, 64, %s10, [#allocation14], 32, 32, 2
    $region65: #{tpu_custom_call.1} parent=1 // pred_fallthru
      _
    // Predicated region
    $region66: #{tpu_custom_call.1} parent=1 // pred_check
      _
    $region67: #{tpu_custom_call.1} parent=1 // pred_check_branch
      %2214 = sbr.rel (0) target = $region69
    $region68: #{tpu_custom_call.1} parent=1 // pred_region
      %2215 = dma.done [#allocation5], 256
    $region69: #{tpu_custom_call.1} parent=1 // pred_fallthru
      _
    // Predicated region
    $region70: #{tpu_custom_call.1} parent=1 // pred_check
      _
    $region71: #{tpu_custom_call.1} parent=1 // pred_check_branch
      %2217 = sbr.rel (0) target = $region73
    $region72: #{tpu_custom_call.1} parent=1 // pred_region
      %2218 = dma.done [#allocation14], 64
    $region73: #{tpu_custom_call.1} parent=1 // pred_fallthru
      _
    // Predicated region
    $region74: #{tpu_custom_call.1} parent=1 // pred_check
      _
    $region75: #{tpu_custom_call.1} parent=1 // pred_check_branch
      %2220 = sbr.rel (0) target = $region77
    $region76: #{tpu_custom_call.1} parent=1 // pred_region
      %2221 = dma.done [#allocation14], 64
    $region77: #{tpu_custom_call.1} parent=1 // pred_fallthru
      _
    %2222 = vsyncpa [#allocation4], 1
    %2223 = vsyncpa [#allocation7], 1
    %2224 = vsyncpa [#allocation10], 1
    %2225 = vsyncpa [#allocation5], 1
    %2226 = vsyncpa [#allocation14], 1

</llo_original>
